<compile_context>
chip_gen: v7x
topology: tpu7x:2x2x1
jax: 0.10.0
libtpu: 0.0.40
codegen_flags: <defaults>
</compile_context>

<pallas_src>
import functools

import jax
import jax.numpy as jnp
from jax.experimental import pallas as pl
from jax.experimental.pallas import tpu as pltpu


MATMUL_DTYPE = jnp.bfloat16   # MXU operand dtype; accumulation stays f32
OUT_WIDTH = 128               # lane-dense packed output slab width
USED_COLS = 8                 # [score, w0, w1, w2, sub_cos, loc_cos, rel_score, rel_ix]
_EPS_SQ = 1e-24               # F.normalize(eps=1e-12) applied to the squared norm


# ----------------------------------------------------------------------------
# Fused Pallas kernel: matching MLPs + cosine sims + weight_fc softmax +
#                      masked running max/argmax + weighted score sum
# ----------------------------------------------------------------------------
def _joint_matching_kernel(hidden_ref, lang_ref, vis_sl_ref, vis_rel_ref, masks_ref,
                           wl1_ref, bl1_ref, wl2_ref, bl2_ref,
                           wv1_ref, bv1_ref, wv2_ref, bv2_ref,
                           wr1_ref, br1_ref, wr2_ref, br2_ref,
                           wfc_ref, bfc_ref,
                           sel3_ref, sel2_ref, ones_ref,
                           out_ref, *, jemb_dim, m):
    J = jemb_dim
    f32 = jnp.float32

    def mlp(x, w1, b1, w2, b2):
        # Linear + folded eval-mode BN, ReLU (Dropout = eval no-op), Linear + BN.
        h = jnp.dot(x, w1, preferred_element_type=f32) + b1
        h = jnp.maximum(h, 0.0).astype(w2.dtype)
        return jnp.dot(h, w2, preferred_element_type=f32) + b2

    def inv_norm(ss):
        # 1 / max(||x||, 1e-12)  ==  rsqrt(max(||x||^2, 1e-24)); EUP rsqrt.
        return jax.lax.rsqrt(jnp.maximum(ss, _EPS_SQ))

    # --- language path: one fat block-diagonal matmul pair for all 3 heads ---
    lang_emb = mlp(lang_ref[...], wl1_ref[...], bl1_ref[...],
                   wl2_ref[...], bl2_ref[...])                       # (t, 3J) f32
    # --- sub+loc visual path: one block-diagonal matmul pair for both heads ---
    vis_sl_emb = mlp(vis_sl_ref[...], wv1_ref[...], bv1_ref[...],
                     wv2_ref[...], bv2_ref[...])                     # (t, 2J) f32

    sel3 = sel3_ref[...]     # (3J, 3) 0/1 segment selector
    sel2 = sel2_ref[...]     # (2J, 2) 0/1 segment selector
    ones_j = ones_ref[...]   # (J, 1)

    # Per-head squared norms / cosine numerators as MXU segment-sum matmuls
    # (no per-head XLU lane reductions); cos = num * rsqrt(ss_v) * rsqrt(ss_l).
    ss_lang = jnp.dot(lang_emb * lang_emb, sel3, preferred_element_type=f32)    # (t, 3)
    inv_lang = inv_norm(ss_lang)

    lang_sl = lang_emb[:, :2 * J]
    num_sl = jnp.dot(vis_sl_emb * lang_sl, sel2, preferred_element_type=f32)    # (t, 2)
    ss_sl = jnp.dot(vis_sl_emb * vis_sl_emb, sel2, preferred_element_type=f32)  # (t, 2)
    cos_sl = num_sl * inv_norm(ss_sl) * inv_lang[:, :2]                         # [sub, loc]

    # --- relation head: ONE shared copy of the rel visual weights, static ---
    # unrolled loop over the m context slots with a running (max, argmax) carry.
    le_rel = lang_emb[:, 2 * J:3 * J]          # rel language emb computed ONCE per row
    inv_rel_lang = inv_lang[:, 2:3]
    wr1, br1 = wr1_ref[...], br1_ref[...]
    wr2, br2 = wr2_ref[...], br2_ref[...]
    masks = masks_ref[...]
    din = vis_rel_ref.shape[1] // m

    rel_max = None
    rel_ix = None
    for k in range(m):                                              # m is small & static
        ek = mlp(vis_rel_ref[:, k * din:(k + 1) * din], wr1, br1, wr2, br2)     # (t, J)
        num_k = jnp.dot(ek * le_rel, ones_j, preferred_element_type=f32)        # (t, 1) MXU
        ss_k = jnp.dot(ek * ek, ones_j, preferred_element_type=f32)             # (t, 1) MXU
        cos_k = masks[:, k:k + 1] * (num_k * inv_norm(ss_k) * inv_rel_lang)
        if k == 0:
            rel_max = cos_k
            rel_ix = jnp.zeros_like(cos_k)
        else:
            better = cos_k > rel_max          # strict >  => first-occurrence tie-break
            rel_max = jnp.where(better, cos_k, rel_max)
            rel_ix = jnp.where(better, jnp.full_like(rel_ix, float(k)), rel_ix)
    # TODO(synk): torch.max's tie index is unspecified; exact-tie parity may differ.

    # --- weight_fc softmax: single (t,H)x(H,3) MXU matmul ---
    logits = jnp.dot(hidden_ref[...], wfc_ref[...],
                     preferred_element_type=f32) + bfc_ref[...]                  # (t, 3)
    lmax = jnp.max(logits, axis=1, keepdims=True)
    e = jnp.exp(logits - lmax)
    w = e / jnp.sum(e, axis=1, keepdims=True)

    # scores = (weights * cat([sub, loc, rel], 1)).sum(1)
    scores = (w[:, 0:1] * cos_sl[:, 0:1] + w[:, 1:2] * cos_sl[:, 1:2]
              + w[:, 2:3] * rel_max)

    # Lane-dense packed output slab: one concat, one full-width unmasked store.
    pad = jnp.zeros((w.shape[0], out_ref.shape[1] - USED_COLS), f32)
    out_ref[...] = jnp.concatenate([scores, w, cos_sl, rel_max, rel_ix, pad], axis=1)


# ----------------------------------------------------------------------------
# Wrapper: tiling / VMEM budget / pallas_call
# ----------------------------------------------------------------------------
def _round_up(x, k):
    return (x + k - 1) // k * k


def _tpu_vmem_bytes():
    try:
        return int(pltpu.get_tpu_info().vmem_capacity_bytes)
    except Exception:                      # conservative default (v7x per-core VMEM)
        return 64 * 1024 * 1024


def _choose_tile(n8, cap):
    """Largest row tile <= cap, but split into >=2 grid steps when possible so
    the 'parallel' grid axis can shard rows across both v7x TensorCores."""
    if n8 >= 2 * cap:
        return cap
    if n8 <= 8:
        return 8
    return min(cap, _round_up(-(-n8 // 2), 8))


def fused_joint_match(hidden, lang_cat, vis_sl, vis_rel, masks, packed, *, jemb_dim, m):
    """Runs the fused kernel. Returns (scores(n,), weights(n,3), rel_ixs(n,))."""
    n = hidden.shape[0]
    n8 = _round_up(max(n, 8), 8)

    vmem_phys = _tpu_vmem_bytes()
    # Row-tile cap / VMEM budget per generation: 512 rows & ~96 MiB on v5e/v6e
    # (128 MiB physical); 256 rows & <48 MiB on v7x (64 MiB physical).
    tile_cap = 512 if vmem_phys >= 96 * 1024 * 1024 else 256
    vmem_limit = min((vmem_phys * 3) // 4, 100 * 1024 * 1024)

    tile = _choose_tile(n8, tile_cap)
    n_pad = _round_up(n8, tile)

    def pad_rows(x, dtype):
        x = x.astype(dtype)
        return x if n_pad == x.shape[0] else jnp.pad(x, ((0, n_pad - x.shape[0]), (0, 0)))

    hidden_p = pad_rows(hidden, MATMUL_DTYPE)      # bf16 MXU operands, f32 accumulation
    lang_p = pad_rows(lang_cat, MATMUL_DTYPE)
    vis_sl_p = pad_rows(vis_sl, MATMUL_DTYPE)
    vis_rel_p = pad_rows(vis_rel, MATMUL_DTYPE)
    masks_p = pad_rows(masks, jnp.float32)

    consts = packed                                # weights / biases / selectors

    def row_spec(x):
        return pl.BlockSpec((tile, x.shape[1]), lambda i: (i, 0))

    def const_spec(x):   # constant index_map -> stays VMEM-resident across the grid
        return pl.BlockSpec(x.shape, lambda i: (0, 0))

    kernel = functools.partial(_joint_matching_kernel, jemb_dim=jemb_dim, m=m)
    out = pl.pallas_call(
        kernel,
        out_shape=jax.ShapeDtypeStruct((n_pad, OUT_WIDTH), jnp.float32),
        grid=(n_pad // tile,),
        in_specs=[row_spec(hidden_p), row_spec(lang_p), row_spec(vis_sl_p),
                  row_spec(vis_rel_p), row_spec(masks_p)]
                 + [const_spec(c) for c in consts],
        out_specs=pl.BlockSpec((tile, OUT_WIDTH), lambda i: (i, 0)),
        compiler_params=pltpu.CompilerParams(
            dimension_semantics=("parallel",),
            vmem_limit_bytes=vmem_limit),
    )(hidden_p, lang_p, vis_sl_p, vis_rel_p, masks_p, *consts)

    out = out[:n]
    scores = out[:, 0]
    weights = out[:, 1:4]
    rel_ixs = out[:, 7].astype(jnp.int32)
    return scores, weights, rel_ixs


# ----------------------------------------------------------------------------
# Parameter construction (Linear + eval-mode BatchNorm folded) and packing
# ----------------------------------------------------------------------------
def fold_linear_bn(key, in_dim, out_dim):
    k = jax.random.split(key, 6)
    w = jax.random.normal(k[0], (in_dim, out_dim), jnp.float32) / jnp.sqrt(float(in_dim))
    b = 0.1 * jax.random.normal(k[1], (out_dim,), jnp.float32)
    gamma = 1.0 + 0.1 * jax.random.normal(k[2], (out_dim,), jnp.float32)
    beta = 0.1 * jax.random.normal(k[3], (out_dim,), jnp.float32)
    mean = 0.1 * jax.random.normal(k[4], (out_dim,), jnp.float32)
    var = jnp.abs(jax.random.normal(k[5], (out_dim,), jnp.float32)) + 0.5
    scale = gamma / jnp.sqrt(var + 1e-5)
    wf = w * scale[None, :]
    bf = (b - mean) * scale + beta
    return wf, bf.reshape(1, out_dim)


def make_matching_params(key, vis_dim, lang_dim, jemb_dim):
    k = jax.random.split(key, 4)
    wv1, bv1 = fold_linear_bn(k[0], vis_dim, jemb_dim)
    wv2, bv2 = fold_linear_bn(k[1], jemb_dim, jemb_dim)
    wl1, bl1 = fold_linear_bn(k[2], lang_dim, jemb_dim)
    wl2, bl2 = fold_linear_bn(k[3], jemb_dim, jemb_dim)
    return (wv1, bv1, wv2, bv2, wl1, bl1, wl2, bl2)


def _block_diag(*mats):
    rows = sum(w.shape[0] for w in mats)
    cols = sum(w.shape[1] for w in mats)
    out = jnp.zeros((rows, cols), mats[0].dtype)
    r = c = 0
    for w in mats:
        out = out.at[r:r + w.shape[0], c:c + w.shape[1]].set(w)
        r += w.shape[0]
        c += w.shape[1]
    return out


def pack_matching_params(p, jemb_dim):
    """Pack the 3 language heads and the sub+loc visual heads block-diagonally
    (fat matmuls); keep ONE copy of the rel visual weights (no m-fold
    replication); build static 0/1 selectors for MXU segment-sum reductions."""
    sv1, sb1, sv2, sb2, sl1, slb1, sl2, slb2 = p["sub_match"]
    lv1, lb1, lv2, lb2, ll1, llb1, ll2, llb2 = p["loc_match"]
    rv1, rb1, rv2, rb2, rl1, rlb1, rl2, rlb2 = p["rel_match"]

    wl1 = _block_diag(sl1, ll1, rl1).astype(MATMUL_DTYPE)
    bl1 = jnp.concatenate([slb1, llb1, rlb1], axis=1)
    wl2 = _block_diag(sl2, ll2, rl2).astype(MATMUL_DTYPE)
    bl2 = jnp.concatenate([slb2, llb2, rlb2], axis=1)

    wv1 = _block_diag(sv1, lv1).astype(MATMUL_DTYPE)
    bv1 = jnp.concatenate([sb1, lb1], axis=1)
    wv2 = _block_diag(sv2, lv2).astype(MATMUL_DTYPE)
    bv2 = jnp.concatenate([sb2, lb2], axis=1)

    wr1 = rv1.astype(MATMUL_DTYPE)   # single copy, shared across the m context slots
    br1 = rb1
    wr2 = rv2.astype(MATMUL_DTYPE)
    br2 = rb2

    wfc = p["wfc"].astype(MATMUL_DTYPE)   # (hidden_dim, 3) for the MXU matmul
    bfc = p["bfc"]                        # (1, 3)

    J = jemb_dim
    heads3 = jnp.arange(3 * J, dtype=jnp.int32) // J
    sel3 = (heads3[:, None] == jnp.arange(3)[None, :]).astype(jnp.float32)   # (3J, 3)
    heads2 = jnp.arange(2 * J, dtype=jnp.int32) // J
    sel2 = (heads2[:, None] == jnp.arange(2)[None, :]).astype(jnp.float32)   # (2J, 2)
    ones_j = jnp.ones((J, 1), jnp.float32)

    return (wl1, bl1, wl2, bl2, wv1, bv1, wv2, bv2,
            wr1, br1, wr2, br2, wfc, bfc, sel3, sel2, ones_j)


# ----------------------------------------------------------------------------
# Stand-in encoders (plain JAX glue; their definitions are not in the reference)
# ----------------------------------------------------------------------------
# TODO(synk): RNNEncoder (embedding + LSTM) is not provided in the reference;
#             replaced by a deterministic embedding + tanh-projection stand-in.
def rnn_encoder_standin(labels, emb_table, wc, wh):
    embedded = emb_table[labels]                                  # (n, seq, wvec)
    context = jnp.tanh(jnp.einsum("nse,eh->nsh", embedded, wc))   # (n, seq, H)
    hidden = jnp.tanh(jnp.mean(context, axis=1) @ wh)             # (n, H)
    return context, hidden, embedded


# TODO(synk): PhraseAttention definition is not provided; standard
#             masked-softmax attention over word embeddings is used.
def phrase_attention_standin(context, embedded, labels, w_attn):
    logits = jnp.einsum("nsh,h->ns", context, w_attn)             # (n, seq)
    mask = (labels != 0).astype(jnp.float32)
    logits = jnp.where(mask > 0, logits, -1e9)
    attn = jax.nn.softmax(logits, axis=1) * mask
    attn = attn / jnp.maximum(jnp.sum(attn, axis=1, keepdims=True), 1e-12)
    phrase_emb = jnp.einsum("ns,nse->ne", attn, embedded)         # (n, wvec)
    return attn, phrase_emb


# TODO(synk): SubjectEncoder (grid attention + attribute head) is not provided;
#             deterministic stand-in producing the documented output shapes.
def subject_encoder_standin(pool5, fc7, phrase_emb, wg, wj, watt):
    n = fc7.shape[0]
    fc7_grid = fc7.reshape(n, fc7.shape[1], -1).transpose(0, 2, 1)    # (n, 49, fc7_dim)
    pool_grid = pool5.reshape(n, pool5.shape[1], -1).transpose(0, 2, 1)
    grid = jnp.concatenate([pool_grid, fc7_grid], axis=-1)            # (n, 49, p5+fc7)
    attn_logits = jnp.einsum("ngc,ce,ne->ng", grid, wg, phrase_emb)   # (n, 49)
    sub_grid_attn = jax.nn.softmax(attn_logits, axis=1)
    attended_fc7 = jnp.einsum("ng,ngc->nc", sub_grid_attn, fc7_grid)  # (n, fc7_dim)
    sub_feats = jnp.concatenate([attended_fc7, jnp.tanh(attended_fc7 @ wj)], axis=1)
    att_scores = jax.nn.sigmoid(attended_fc7 @ watt)                  # (n, num_atts)
    return sub_feats, sub_grid_attn, att_scores


# TODO(synk): LocationEncoder / RelationEncoder definitions are not provided;
#             deterministic linear-projection stand-ins are used.
def location_encoder_standin(lfeats, dif_lfeats, wloc):
    return jnp.tanh(jnp.concatenate([lfeats, dif_lfeats], axis=1) @ wloc)


def relation_encoder_standin(cxt_fc7, cxt_lfeats, wrel):
    feats = jnp.concatenate([cxt_fc7, cxt_lfeats], axis=-1)           # (n, m, fc7+5)
    rel_feats = jnp.tanh(jnp.einsum("nmc,cj->nmj", feats, wrel))      # (n, m, jemb)
    masks = (jnp.sum(jnp.abs(cxt_lfeats), axis=-1) != 0).astype(jnp.float32)
    return rel_feats, masks


# ----------------------------------------------------------------------------
# JointMatching forward
# ----------------------------------------------------------------------------
def joint_matching_forward(params, pool5, fc7, lfeats, dif_lfeats,
                           cxt_fc7, cxt_lfeats, labels):
    p = params
    context, hidden, embedded = rnn_encoder_standin(
        labels, p["emb_table"], p["wc"], p["wh"])

    sub_attn, sub_phrase_emb = phrase_attention_standin(
        context, embedded, labels, p["w_sub_attn"])
    loc_attn, loc_phrase_emb = phrase_attention_standin(
        context, embedded, labels, p["w_loc_attn"])
    rel_attn, rel_phrase_emb = phrase_attention_standin(
        context, embedded, labels, p["w_rel_attn"])

    sub_feats, sub_grid_attn, att_scores = subject_encoder_standin(
        pool5, fc7, sub_phrase_emb, p["wg"], p["wj"], p["watt"])
    loc_feats = location_encoder_standin(lfeats, dif_lfeats, p["wloc"])
    rel_feats, masks = relation_encoder_standin(cxt_fc7, cxt_lfeats, p["wrel"])

    n, m, _ = rel_feats.shape
    jemb_dim = p["sub_match"][2].shape[0]

    # Lane-concatenated per-row inputs; rel visual features stay un-replicated.
    lang_cat = jnp.concatenate(
        [sub_phrase_emb, loc_phrase_emb, rel_phrase_emb], axis=1)     # (n, 3*wvec)
    vis_sl = jnp.concatenate([sub_feats, loc_feats], axis=1)          # (n, sub+loc dims)
    vis_rel = rel_feats.reshape(n, m * jemb_dim)                      # (n, m*jemb)
    packed = pack_matching_params(p, jemb_dim)

    # --- single fused Pallas kernel: all matching heads + weights + score ---
    scores, weights, rel_ixs = fused_joint_match(
        hidden, lang_cat, vis_sl, vis_rel, masks, packed, jemb_dim=jemb_dim, m=m)

    return (scores, sub_grid_attn, sub_attn, loc_attn, rel_attn,
            rel_ixs, weights, att_scores)


# ----------------------------------------------------------------------------
if __name__ == "__main__":
    key = jax.random.PRNGKey(0)

    # Small, module-consistent shapes
    n, m, seq_len = 8, 4, 8
    pool5_dim, fc7_dim = 4, 8
    jemb_dim, word_vec_size = 32, 16
    hidden_size, num_dirs, num_layers = 16, 2, 1
    hidden_dim = num_layers * num_dirs * hidden_size      # 32
    vocab_size, num_atts = 20, 5
    sub_vis_dim = fc7_dim + jemb_dim                      # 40

    ks = jax.random.split(key, 24)

    params = {
        "emb_table": 0.1 * jax.random.normal(ks[0], (vocab_size, word_vec_size), jnp.float32),
        "wc": jax.random.normal(ks[1], (word_vec_size, hidden_dim), jnp.float32) / 4.0,
        "wh": jax.random.normal(ks[2], (hidden_dim, hidden_dim), jnp.float32) / jnp.sqrt(32.0),
        "w_sub_attn": jax.random.normal(ks[3], (hidden_dim,), jnp.float32) / 4.0,
        "w_loc_attn": jax.random.normal(ks[4], (hidden_dim,), jnp.float32) / 4.0,
        "w_rel_attn": jax.random.normal(ks[5], (hidden_dim,), jnp.float32) / 4.0,
        "wg": jax.random.normal(ks[6], (pool5_dim + fc7_dim, word_vec_size), jnp.float32) / 4.0,
        "wj": jax.random.normal(ks[7], (fc7_dim, jemb_dim), jnp.float32) / 3.0,
        "watt": jax.random.normal(ks[8], (fc7_dim, num_atts), jnp.float32) / 3.0,
        "wloc": jax.random.normal(ks[9], (5 + 25, jemb_dim), jnp.float32) / 4.0,
        "wrel": jax.random.normal(ks[10], (fc7_dim + 5, jemb_dim), jnp.float32) / 3.0,
        "wfc": jax.random.normal(ks[11], (hidden_dim, 3), jnp.float32) / jnp.sqrt(32.0),
        "bfc": 0.05 * jax.random.normal(ks[12], (1, 3), jnp.float32),
        "sub_match": make_matching_params(ks[13], sub_vis_dim, word_vec_size, jemb_dim),
        "loc_match": make_matching_params(ks[14], jemb_dim, word_vec_size, jemb_dim),
        "rel_match": make_matching_params(ks[15], jemb_dim, word_vec_size, jemb_dim),
    }

    # Inputs
    pool5 = jax.random.normal(ks[16], (n, pool5_dim, 7, 7), jnp.float32)   # NCHW
    fc7 = jax.random.normal(ks[17], (n, fc7_dim, 7, 7), jnp.float32)       # NCHW
    lfeats = jax.random.normal(ks[18], (n, 5), jnp.float32)
    dif_lfeats = jax.random.normal(ks[19], (n, 25), jnp.float32)
    cxt_fc7 = jax.random.normal(ks[20], (n, m, fc7_dim), jnp.float32)
    cxt_lfeats = jax.random.normal(ks[21], (n, m, 5), jnp.float32)
    # zero out one context object per row to exercise masking
    cxt_lfeats = cxt_lfeats.at[:, -1, :].set(0.0)
    cxt_fc7 = cxt_fc7.at[:, -1, :].set(0.0)
    labels = jax.random.randint(ks[22], (n, seq_len), 1, vocab_size)
    lens = jax.random.randint(ks[23], (n, 1), 3, seq_len + 1)
    labels = jnp.where(jnp.arange(seq_len)[None, :] < lens, labels, 0).astype(jnp.int32)

    fwd = jax.jit(joint_matching_forward)
    outs = fwd(params, pool5, fc7, lfeats, dif_lfeats, cxt_fc7, cxt_lfeats, labels)
    outs = jax.block_until_ready(outs)

    (scores, sub_grid_attn, sub_attn, loc_attn, rel_attn,
     rel_ixs, weights, att_scores) = outs
    assert scores.shape == (n,)
    assert sub_grid_attn.shape == (n, 49)
    assert sub_attn.shape == (n, seq_len)
    assert loc_attn.shape == (n, seq_len)
    assert rel_attn.shape == (n, seq_len)
    assert rel_ixs.shape == (n,)
    assert weights.shape == (n, 3)
    assert att_scores.shape == (n, num_atts)
    assert jnp.all(jnp.isfinite(scores))
    assert jnp.all(jnp.isfinite(weights))
    assert jnp.allclose(jnp.sum(weights, axis=1), 1.0, atol=1e-3)
    assert jnp.all((rel_ixs >= 0) & (rel_ixs < m))

    print("KERNEL_OK")
</pallas_src>

<mosaic_0001>
module attributes {stable_mosaic.version = 11 : i64} {
  func.func @_joint_matching_kernel(%arg0: i32, %arg1: memref<8x32xbf16, #tpu.memory_space<vmem>>, %arg2: memref<8x48xbf16, #tpu.memory_space<vmem>>, %arg3: memref<8x72xbf16, #tpu.memory_space<vmem>>, %arg4: memref<8x128xbf16, #tpu.memory_space<vmem>>, %arg5: memref<8x4xf32, #tpu.memory_space<vmem>>, %arg6: memref<48x96xbf16, #tpu.memory_space<vmem>>, %arg7: memref<1x96xf32, #tpu.memory_space<vmem>>, %arg8: memref<96x96xbf16, #tpu.memory_space<vmem>>, %arg9: memref<1x96xf32, #tpu.memory_space<vmem>>, %arg10: memref<72x64xbf16, #tpu.memory_space<vmem>>, %arg11: memref<1x64xf32, #tpu.memory_space<vmem>>, %arg12: memref<64x64xbf16, #tpu.memory_space<vmem>>, %arg13: memref<1x64xf32, #tpu.memory_space<vmem>>, %arg14: memref<32x32xbf16, #tpu.memory_space<vmem>>, %arg15: memref<1x32xf32, #tpu.memory_space<vmem>>, %arg16: memref<32x32xbf16, #tpu.memory_space<vmem>>, %arg17: memref<1x32xf32, #tpu.memory_space<vmem>>, %arg18: memref<32x3xbf16, #tpu.memory_space<vmem>>, %arg19: memref<1x3xf32, #tpu.memory_space<vmem>>, %arg20: memref<96x3xf32, #tpu.memory_space<vmem>>, %arg21: memref<64x2xf32, #tpu.memory_space<vmem>>, %arg22: memref<32x1xf32, #tpu.memory_space<vmem>>, %arg23: memref<8x128xf32, #tpu.memory_space<vmem>>) attributes {dimension_semantics = [#tpu.dimension_semantics<parallel>], iteration_bounds = array<i64: 1>, scalar_prefetch = 0 : i64, scratch_operands = 0 : i64, tpu.core_type = #tpu.core_type<tc>, window_params = [{transform_indices = @transform_0, window_bounds = array<i64: 8, 32>}, {transform_indices = @transform_1, window_bounds = array<i64: 8, 48>}, {transform_indices = @transform_2, window_bounds = array<i64: 8, 72>}, {transform_indices = @transform_3, window_bounds = array<i64: 8, 128>}, {transform_indices = @transform_4, window_bounds = array<i64: 8, 4>}, {pipeline_mode = #tpu.pipeline_mode<synchronous>, transform_indices = @transform_5, window_bounds = array<i64: 48, 96>}, {pipeline_mode = #tpu.pipeline_mode<synchronous>, transform_indices = @transform_6, window_bounds = array<i64: 1, 96>}, {pipeline_mode = #tpu.pipeline_mode<synchronous>, transform_indices = @transform_7, window_bounds = array<i64: 96, 96>}, {pipeline_mode = #tpu.pipeline_mode<synchronous>, transform_indices = @transform_8, window_bounds = array<i64: 1, 96>}, {pipeline_mode = #tpu.pipeline_mode<synchronous>, transform_indices = @transform_9, window_bounds = array<i64: 72, 64>}, {pipeline_mode = #tpu.pipeline_mode<synchronous>, transform_indices = @transform_10, window_bounds = array<i64: 1, 64>}, {pipeline_mode = #tpu.pipeline_mode<synchronous>, transform_indices = @transform_11, window_bounds = array<i64: 64, 64>}, {pipeline_mode = #tpu.pipeline_mode<synchronous>, transform_indices = @transform_12, window_bounds = array<i64: 1, 64>}, {pipeline_mode = #tpu.pipeline_mode<synchronous>, transform_indices = @transform_13, window_bounds = array<i64: 32, 32>}, {pipeline_mode = #tpu.pipeline_mode<synchronous>, transform_indices = @transform_14, window_bounds = array<i64: 1, 32>}, {pipeline_mode = #tpu.pipeline_mode<synchronous>, transform_indices = @transform_15, window_bounds = array<i64: 32, 32>}, {pipeline_mode = #tpu.pipeline_mode<synchronous>, transform_indices = @transform_16, window_bounds = array<i64: 1, 32>}, {pipeline_mode = #tpu.pipeline_mode<synchronous>, transform_indices = @transform_17, window_bounds = array<i64: 32, 3>}, {pipeline_mode = #tpu.pipeline_mode<synchronous>, transform_indices = @transform_18, window_bounds = array<i64: 1, 3>}, {pipeline_mode = #tpu.pipeline_mode<synchronous>, transform_indices = @transform_19, window_bounds = array<i64: 96, 3>}, {pipeline_mode = #tpu.pipeline_mode<synchronous>, transform_indices = @transform_20, window_bounds = array<i64: 64, 2>}, {pipeline_mode = #tpu.pipeline_mode<synchronous>, transform_indices = @transform_21, window_bounds = array<i64: 32, 1>}, {transform_indices = @transform_22, window_bounds = array<i64: 8, 128>}]} {
    %c0 = arith.constant 0 : index
    %c0_0 = arith.constant 0 : index
    %0 = vector.load %arg2[%c0, %c0_0] : memref<8x48xbf16, #tpu.memory_space<vmem>>, vector<8x48xbf16>
    %c0_1 = arith.constant 0 : index
    %c0_2 = arith.constant 0 : index
    %1 = vector.load %arg6[%c0_1, %c0_2] : memref<48x96xbf16, #tpu.memory_space<vmem>>, vector<48x96xbf16>
    %c0_3 = arith.constant 0 : index
    %c0_4 = arith.constant 0 : index
    %2 = vector.load %arg7[%c0_3, %c0_4] : memref<1x96xf32, #tpu.memory_space<vmem>>, vector<1x96xf32>
    %c0_5 = arith.constant 0 : index
    %c0_6 = arith.constant 0 : index
    %3 = vector.load %arg8[%c0_5, %c0_6] : memref<96x96xbf16, #tpu.memory_space<vmem>>, vector<96x96xbf16>
    %c0_7 = arith.constant 0 : index
    %c0_8 = arith.constant 0 : index
    %4 = vector.load %arg9[%c0_7, %c0_8] : memref<1x96xf32, #tpu.memory_space<vmem>>, vector<1x96xf32>
    %cst = arith.constant dense<0.000000e+00> : vector<8x96xf32>
    %5 = tpu.matmul %0, %1, %cst {dimension_numbers = #tpu.dot_dimension_numbers<[1], [0], [0], [1], [0, 0, 1, 1], [], []>} : vector<8x48xbf16>, vector<48x96xbf16>, vector<8x96xf32> -> vector<8x96xf32>
    %6 = vector.broadcast %2 : vector<1x96xf32> to vector<8x96xf32>
    %7 = arith.addf %5, %6 : vector<8x96xf32>
    %cst_9 = arith.constant 0.000000e+00 : f32
    %8 = vector.broadcast %cst_9 : f32 to vector<8x96xf32>
    %9 = arith.maximumf %7, %8 : vector<8x96xf32>
    %10 = arith.truncf %9 : vector<8x96xf32> to vector<8x96xbf16>
    %cst_10 = arith.constant dense<0.000000e+00> : vector<8x96xf32>
    %11 = tpu.matmul %10, %3, %cst_10 {dimension_numbers = #tpu.dot_dimension_numbers<[1], [0], [0], [1], [0, 0, 1, 1], [], []>} : vector<8x96xbf16>, vector<96x96xbf16>, vector<8x96xf32> -> vector<8x96xf32>
    %12 = vector.broadcast %4 : vector<1x96xf32> to vector<8x96xf32>
    %13 = arith.addf %11, %12 : vector<8x96xf32>
    %c0_11 = arith.constant 0 : index
    %c0_12 = arith.constant 0 : index
    %14 = vector.load %arg3[%c0_11, %c0_12] : memref<8x72xbf16, #tpu.memory_space<vmem>>, vector<8x72xbf16>
    %c0_13 = arith.constant 0 : index
    %c0_14 = arith.constant 0 : index
    %15 = vector.load %arg10[%c0_13, %c0_14] : memref<72x64xbf16, #tpu.memory_space<vmem>>, vector<72x64xbf16>
    %c0_15 = arith.constant 0 : index
    %c0_16 = arith.constant 0 : index
    %16 = vector.load %arg11[%c0_15, %c0_16] : memref<1x64xf32, #tpu.memory_space<vmem>>, vector<1x64xf32>
    %c0_17 = arith.constant 0 : index
    %c0_18 = arith.constant 0 : index
    %17 = vector.load %arg12[%c0_17, %c0_18] : memref<64x64xbf16, #tpu.memory_space<vmem>>, vector<64x64xbf16>
    %c0_19 = arith.constant 0 : index
    %c0_20 = arith.constant 0 : index
    %18 = vector.load %arg13[%c0_19, %c0_20] : memref<1x64xf32, #tpu.memory_space<vmem>>, vector<1x64xf32>
    %cst_21 = arith.constant dense<0.000000e+00> : vector<8x64xf32>
    %19 = tpu.matmul %14, %15, %cst_21 {dimension_numbers = #tpu.dot_dimension_numbers<[1], [0], [0], [1], [0, 0, 1, 1], [], []>} : vector<8x72xbf16>, vector<72x64xbf16>, vector<8x64xf32> -> vector<8x64xf32>
    %20 = vector.broadcast %16 : vector<1x64xf32> to vector<8x64xf32>
    %21 = arith.addf %19, %20 : vector<8x64xf32>
    %cst_22 = arith.constant 0.000000e+00 : f32
    %22 = vector.broadcast %cst_22 : f32 to vector<8x64xf32>
    %23 = arith.maximumf %21, %22 : vector<8x64xf32>
    %24 = arith.truncf %23 : vector<8x64xf32> to vector<8x64xbf16>
    %cst_23 = arith.constant dense<0.000000e+00> : vector<8x64xf32>
    %25 = tpu.matmul %24, %17, %cst_23 {dimension_numbers = #tpu.dot_dimension_numbers<[1], [0], [0], [1], [0, 0, 1, 1], [], []>} : vector<8x64xbf16>, vector<64x64xbf16>, vector<8x64xf32> -> vector<8x64xf32>
    %26 = vector.broadcast %18 : vector<1x64xf32> to vector<8x64xf32>
    %27 = arith.addf %25, %26 : vector<8x64xf32>
    %c0_24 = arith.constant 0 : index
    %c0_25 = arith.constant 0 : index
    %28 = vector.load %arg20[%c0_24, %c0_25] : memref<96x3xf32, #tpu.memory_space<vmem>>, vector<96x3xf32>
    %c0_26 = arith.constant 0 : index
    %c0_27 = arith.constant 0 : index
    %29 = vector.load %arg21[%c0_26, %c0_27] : memref<64x2xf32, #tpu.memory_space<vmem>>, vector<64x2xf32>
    %c0_28 = arith.constant 0 : index
    %c0_29 = arith.constant 0 : index
    %30 = vector.load %arg22[%c0_28, %c0_29] : memref<32x1xf32, #tpu.memory_space<vmem>>, vector<32x1xf32>
    %31 = arith.mulf %13, %13 : vector<8x96xf32>
    %cst_30 = arith.constant dense<0.000000e+00> : vector<8x3xf32>
    %32 = tpu.matmul %31, %28, %cst_30 {dimension_numbers = #tpu.dot_dimension_numbers<[1], [0], [0], [1], [0, 0, 1, 1], [], []>} : vector<8x96xf32>, vector<96x3xf32>, vector<8x3xf32> -> vector<8x3xf32>
    %cst_31 = arith.constant 1.000000e-24 : f32
    %33 = vector.broadcast %cst_31 : f32 to vector<8x3xf32>
    %34 = arith.maximumf %32, %33 : vector<8x3xf32>
    %35 = math.rsqrt %34 : vector<8x3xf32>
    %36 = vector.extract_strided_slice %13 {offsets = [0, 0], sizes = [8, 64], strides = [1, 1]} : vector<8x96xf32> to vector<8x64xf32>
    %37 = arith.mulf %27, %36 : vector<8x64xf32>
    %cst_32 = arith.constant dense<0.000000e+00> : vector<8x2xf32>
    %38 = tpu.matmul %37, %29, %cst_32 {dimension_numbers = #tpu.dot_dimension_numbers<[1], [0], [0], [1], [0, 0, 1, 1], [], []>} : vector<8x64xf32>, vector<64x2xf32>, vector<8x2xf32> -> vector<8x2xf32>
    %39 = arith.mulf %27, %27 : vector<8x64xf32>
    %cst_33 = arith.constant dense<0.000000e+00> : vector<8x2xf32>
    %40 = tpu.matmul %39, %29, %cst_33 {dimension_numbers = #tpu.dot_dimension_numbers<[1], [0], [0], [1], [0, 0, 1, 1], [], []>} : vector<8x64xf32>, vector<64x2xf32>, vector<8x2xf32> -> vector<8x2xf32>
    %cst_34 = arith.constant 1.000000e-24 : f32
    %41 = vector.broadcast %cst_34 : f32 to vector<8x2xf32>
    %42 = arith.maximumf %40, %41 : vector<8x2xf32>
    %43 = math.rsqrt %42 : vector<8x2xf32>
    %44 = arith.mulf %38, %43 : vector<8x2xf32>
    %45 = vector.extract_strided_slice %35 {offsets = [0, 0], sizes = [8, 2], strides = [1, 1]} : vector<8x3xf32> to vector<8x2xf32>
    %46 = arith.mulf %44, %45 : vector<8x2xf32>
    %47 = vector.extract_strided_slice %13 {offsets = [0, 64], sizes = [8, 32], strides = [1, 1]} : vector<8x96xf32> to vector<8x32xf32>
    %48 = vector.extract_strided_slice %35 {offsets = [0, 2], sizes = [8, 1], strides = [1, 1]} : vector<8x3xf32> to vector<8x1xf32>
    %c0_35 = arith.constant 0 : index
    %c0_36 = arith.constant 0 : index
    %49 = vector.load %arg14[%c0_35, %c0_36] : memref<32x32xbf16, #tpu.memory_space<vmem>>, vector<32x32xbf16>
    %c0_37 = arith.constant 0 : index
    %c0_38 = arith.constant 0 : index
    %50 = vector.load %arg15[%c0_37, %c0_38] : memref<1x32xf32, #tpu.memory_space<vmem>>, vector<1x32xf32>
    %c0_39 = arith.constant 0 : index
    %c0_40 = arith.constant 0 : index
    %51 = vector.load %arg16[%c0_39, %c0_40] : memref<32x32xbf16, #tpu.memory_space<vmem>>, vector<32x32xbf16>
    %c0_41 = arith.constant 0 : index
    %c0_42 = arith.constant 0 : index
    %52 = vector.load %arg17[%c0_41, %c0_42] : memref<1x32xf32, #tpu.memory_space<vmem>>, vector<1x32xf32>
    %c0_43 = arith.constant 0 : index
    %c0_44 = arith.constant 0 : index
    %53 = vector.load %arg5[%c0_43, %c0_44] : memref<8x4xf32, #tpu.memory_space<vmem>>, vector<8x4xf32>
    %c0_45 = arith.constant 0 : index
    %c0_46 = arith.constant 0 : index
    %54 = vector.load %arg4[%c0_45, %c0_46] : memref<8x128xbf16, #tpu.memory_space<vmem>>, vector<8x32xbf16>
    %cst_47 = arith.constant dense<0.000000e+00> : vector<8x32xf32>
    %55 = tpu.matmul %54, %49, %cst_47 {dimension_numbers = #tpu.dot_dimension_numbers<[1], [0], [0], [1], [0, 0, 1, 1], [], []>} : vector<8x32xbf16>, vector<32x32xbf16>, vector<8x32xf32> -> vector<8x32xf32>
    %56 = vector.broadcast %50 : vector<1x32xf32> to vector<8x32xf32>
    %57 = arith.addf %55, %56 : vector<8x32xf32>
    %cst_48 = arith.constant 0.000000e+00 : f32
    %58 = vector.broadcast %cst_48 : f32 to vector<8x32xf32>
    %59 = arith.maximumf %57, %58 : vector<8x32xf32>
    %60 = arith.truncf %59 : vector<8x32xf32> to vector<8x32xbf16>
    %cst_49 = arith.constant dense<0.000000e+00> : vector<8x32xf32>
    %61 = tpu.matmul %60, %51, %cst_49 {dimension_numbers = #tpu.dot_dimension_numbers<[1], [0], [0], [1], [0, 0, 1, 1], [], []>} : vector<8x32xbf16>, vector<32x32xbf16>, vector<8x32xf32> -> vector<8x32xf32>
    %62 = vector.broadcast %52 : vector<1x32xf32> to vector<8x32xf32>
    %63 = arith.addf %61, %62 : vector<8x32xf32>
    %64 = arith.mulf %63, %47 : vector<8x32xf32>
    %cst_50 = arith.constant dense<0.000000e+00> : vector<8x1xf32>
    %65 = tpu.matmul %64, %30, %cst_50 {dimension_numbers = #tpu.dot_dimension_numbers<[1], [0], [0], [1], [0, 0, 1, 1], [], []>} : vector<8x32xf32>, vector<32x1xf32>, vector<8x1xf32> -> vector<8x1xf32>
    %66 = arith.mulf %63, %63 : vector<8x32xf32>
    %cst_51 = arith.constant dense<0.000000e+00> : vector<8x1xf32>
    %67 = tpu.matmul %66, %30, %cst_51 {dimension_numbers = #tpu.dot_dimension_numbers<[1], [0], [0], [1], [0, 0, 1, 1], [], []>} : vector<8x32xf32>, vector<32x1xf32>, vector<8x1xf32> -> vector<8x1xf32>
    %68 = vector.extract_strided_slice %53 {offsets = [0, 0], sizes = [8, 1], strides = [1, 1]} : vector<8x4xf32> to vector<8x1xf32>
    %cst_52 = arith.constant 1.000000e-24 : f32
    %69 = vector.broadcast %cst_52 : f32 to vector<8x1xf32>
    %70 = arith.maximumf %67, %69 : vector<8x1xf32>
    %71 = math.rsqrt %70 : vector<8x1xf32>
    %72 = arith.mulf %65, %71 : vector<8x1xf32>
    %73 = arith.mulf %72, %48 : vector<8x1xf32>
    %74 = arith.mulf %68, %73 : vector<8x1xf32>
    %cst_53 = arith.constant 0.000000e+00 : f32
    %75 = vector.broadcast %cst_53 : f32 to vector<8x1xf32>
    %c0_54 = arith.constant 0 : index
    %c32 = arith.constant 32 : index
    %76 = vector.load %arg4[%c0_54, %c32] : memref<8x128xbf16, #tpu.memory_space<vmem>>, vector<8x32xbf16>
    %cst_55 = arith.constant dense<0.000000e+00> : vector<8x32xf32>
    %77 = tpu.matmul %76, %49, %cst_55 {dimension_numbers = #tpu.dot_dimension_numbers<[1], [0], [0], [1], [0, 0, 1, 1], [], []>} : vector<8x32xbf16>, vector<32x32xbf16>, vector<8x32xf32> -> vector<8x32xf32>
    %78 = vector.broadcast %50 : vector<1x32xf32> to vector<8x32xf32>
    %79 = arith.addf %77, %78 : vector<8x32xf32>
    %cst_56 = arith.constant 0.000000e+00 : f32
    %80 = vector.broadcast %cst_56 : f32 to vector<8x32xf32>
    %81 = arith.maximumf %79, %80 : vector<8x32xf32>
    %82 = arith.truncf %81 : vector<8x32xf32> to vector<8x32xbf16>
    %cst_57 = arith.constant dense<0.000000e+00> : vector<8x32xf32>
    %83 = tpu.matmul %82, %51, %cst_57 {dimension_numbers = #tpu.dot_dimension_numbers<[1], [0], [0], [1], [0, 0, 1, 1], [], []>} : vector<8x32xbf16>, vector<32x32xbf16>, vector<8x32xf32> -> vector<8x32xf32>
    %84 = vector.broadcast %52 : vector<1x32xf32> to vector<8x32xf32>
    %85 = arith.addf %83, %84 : vector<8x32xf32>
    %86 = arith.mulf %85, %47 : vector<8x32xf32>
    %cst_58 = arith.constant dense<0.000000e+00> : vector<8x1xf32>
    %87 = tpu.matmul %86, %30, %cst_58 {dimension_numbers = #tpu.dot_dimension_numbers<[1], [0], [0], [1], [0, 0, 1, 1], [], []>} : vector<8x32xf32>, vector<32x1xf32>, vector<8x1xf32> -> vector<8x1xf32>
    %88 = arith.mulf %85, %85 : vector<8x32xf32>
    %cst_59 = arith.constant dense<0.000000e+00> : vector<8x1xf32>
    %89 = tpu.matmul %88, %30, %cst_59 {dimension_numbers = #tpu.dot_dimension_numbers<[1], [0], [0], [1], [0, 0, 1, 1], [], []>} : vector<8x32xf32>, vector<32x1xf32>, vector<8x1xf32> -> vector<8x1xf32>
    %90 = vector.extract_strided_slice %53 {offsets = [0, 1], sizes = [8, 1], strides = [1, 1]} : vector<8x4xf32> to vector<8x1xf32>
    %cst_60 = arith.constant 1.000000e-24 : f32
    %91 = vector.broadcast %cst_60 : f32 to vector<8x1xf32>
    %92 = arith.maximumf %89, %91 : vector<8x1xf32>
    %93 = math.rsqrt %92 : vector<8x1xf32>
    %94 = arith.mulf %87, %93 : vector<8x1xf32>
    %95 = arith.mulf %94, %48 : vector<8x1xf32>
    %96 = arith.mulf %90, %95 : vector<8x1xf32>
    %97 = arith.cmpf ogt, %96, %74 : vector<8x1xf32>
    %98 = arith.select %97, %96, %74 : vector<8x1xi1>, vector<8x1xf32>
    %cst_61 = arith.constant 1.000000e+00 : f32
    %99 = vector.broadcast %cst_61 : f32 to vector<8x1xf32>
    %100 = arith.select %97, %99, %75 : vector<8x1xi1>, vector<8x1xf32>
    %c0_62 = arith.constant 0 : index
    %c64 = arith.constant 64 : index
    %101 = vector.load %arg4[%c0_62, %c64] : memref<8x128xbf16, #tpu.memory_space<vmem>>, vector<8x32xbf16>
    %cst_63 = arith.constant dense<0.000000e+00> : vector<8x32xf32>
    %102 = tpu.matmul %101, %49, %cst_63 {dimension_numbers = #tpu.dot_dimension_numbers<[1], [0], [0], [1], [0, 0, 1, 1], [], []>} : vector<8x32xbf16>, vector<32x32xbf16>, vector<8x32xf32> -> vector<8x32xf32>
    %103 = vector.broadcast %50 : vector<1x32xf32> to vector<8x32xf32>
    %104 = arith.addf %102, %103 : vector<8x32xf32>
    %cst_64 = arith.constant 0.000000e+00 : f32
    %105 = vector.broadcast %cst_64 : f32 to vector<8x32xf32>
    %106 = arith.maximumf %104, %105 : vector<8x32xf32>
    %107 = arith.truncf %106 : vector<8x32xf32> to vector<8x32xbf16>
    %cst_65 = arith.constant dense<0.000000e+00> : vector<8x32xf32>
    %108 = tpu.matmul %107, %51, %cst_65 {dimension_numbers = #tpu.dot_dimension_numbers<[1], [0], [0], [1], [0, 0, 1, 1], [], []>} : vector<8x32xbf16>, vector<32x32xbf16>, vector<8x32xf32> -> vector<8x32xf32>
    %109 = vector.broadcast %52 : vector<1x32xf32> to vector<8x32xf32>
    %110 = arith.addf %108, %109 : vector<8x32xf32>
    %111 = arith.mulf %110, %47 : vector<8x32xf32>
    %cst_66 = arith.constant dense<0.000000e+00> : vector<8x1xf32>
    %112 = tpu.matmul %111, %30, %cst_66 {dimension_numbers = #tpu.dot_dimension_numbers<[1], [0], [0], [1], [0, 0, 1, 1], [], []>} : vector<8x32xf32>, vector<32x1xf32>, vector<8x1xf32> -> vector<8x1xf32>
    %113 = arith.mulf %110, %110 : vector<8x32xf32>
    %cst_67 = arith.constant dense<0.000000e+00> : vector<8x1xf32>
    %114 = tpu.matmul %113, %30, %cst_67 {dimension_numbers = #tpu.dot_dimension_numbers<[1], [0], [0], [1], [0, 0, 1, 1], [], []>} : vector<8x32xf32>, vector<32x1xf32>, vector<8x1xf32> -> vector<8x1xf32>
    %115 = vector.extract_strided_slice %53 {offsets = [0, 2], sizes = [8, 1], strides = [1, 1]} : vector<8x4xf32> to vector<8x1xf32>
    %cst_68 = arith.constant 1.000000e-24 : f32
    %116 = vector.broadcast %cst_68 : f32 to vector<8x1xf32>
    %117 = arith.maximumf %114, %116 : vector<8x1xf32>
    %118 = math.rsqrt %117 : vector<8x1xf32>
    %119 = arith.mulf %112, %118 : vector<8x1xf32>
    %120 = arith.mulf %119, %48 : vector<8x1xf32>
    %121 = arith.mulf %115, %120 : vector<8x1xf32>
    %122 = arith.cmpf ogt, %121, %98 : vector<8x1xf32>
    %123 = arith.select %122, %121, %98 : vector<8x1xi1>, vector<8x1xf32>
    %cst_69 = arith.constant 2.000000e+00 : f32
    %124 = vector.broadcast %cst_69 : f32 to vector<8x1xf32>
    %125 = arith.select %122, %124, %100 : vector<8x1xi1>, vector<8x1xf32>
    %c0_70 = arith.constant 0 : index
    %c96 = arith.constant 96 : index
    %126 = vector.load %arg4[%c0_70, %c96] : memref<8x128xbf16, #tpu.memory_space<vmem>>, vector<8x32xbf16>
    %cst_71 = arith.constant dense<0.000000e+00> : vector<8x32xf32>
    %127 = tpu.matmul %126, %49, %cst_71 {dimension_numbers = #tpu.dot_dimension_numbers<[1], [0], [0], [1], [0, 0, 1, 1], [], []>} : vector<8x32xbf16>, vector<32x32xbf16>, vector<8x32xf32> -> vector<8x32xf32>
    %128 = vector.broadcast %50 : vector<1x32xf32> to vector<8x32xf32>
    %129 = arith.addf %127, %128 : vector<8x32xf32>
    %cst_72 = arith.constant 0.000000e+00 : f32
    %130 = vector.broadcast %cst_72 : f32 to vector<8x32xf32>
    %131 = arith.maximumf %129, %130 : vector<8x32xf32>
    %132 = arith.truncf %131 : vector<8x32xf32> to vector<8x32xbf16>
    %cst_73 = arith.constant dense<0.000000e+00> : vector<8x32xf32>
    %133 = tpu.matmul %132, %51, %cst_73 {dimension_numbers = #tpu.dot_dimension_numbers<[1], [0], [0], [1], [0, 0, 1, 1], [], []>} : vector<8x32xbf16>, vector<32x32xbf16>, vector<8x32xf32> -> vector<8x32xf32>
    %134 = vector.broadcast %52 : vector<1x32xf32> to vector<8x32xf32>
    %135 = arith.addf %133, %134 : vector<8x32xf32>
    %136 = arith.mulf %135, %47 : vector<8x32xf32>
    %cst_74 = arith.constant dense<0.000000e+00> : vector<8x1xf32>
    %137 = tpu.matmul %136, %30, %cst_74 {dimension_numbers = #tpu.dot_dimension_numbers<[1], [0], [0], [1], [0, 0, 1, 1], [], []>} : vector<8x32xf32>, vector<32x1xf32>, vector<8x1xf32> -> vector<8x1xf32>
    %138 = arith.mulf %135, %135 : vector<8x32xf32>
    %cst_75 = arith.constant dense<0.000000e+00> : vector<8x1xf32>
    %139 = tpu.matmul %138, %30, %cst_75 {dimension_numbers = #tpu.dot_dimension_numbers<[1], [0], [0], [1], [0, 0, 1, 1], [], []>} : vector<8x32xf32>, vector<32x1xf32>, vector<8x1xf32> -> vector<8x1xf32>
    %140 = vector.extract_strided_slice %53 {offsets = [0, 3], sizes = [8, 1], strides = [1, 1]} : vector<8x4xf32> to vector<8x1xf32>
    %cst_76 = arith.constant 1.000000e-24 : f32
    %141 = vector.broadcast %cst_76 : f32 to vector<8x1xf32>
    %142 = arith.maximumf %139, %141 : vector<8x1xf32>
    %143 = math.rsqrt %142 : vector<8x1xf32>
    %144 = arith.mulf %137, %143 : vector<8x1xf32>
    %145 = arith.mulf %144, %48 : vector<8x1xf32>
    %146 = arith.mulf %140, %145 : vector<8x1xf32>
    %147 = arith.cmpf ogt, %146, %123 : vector<8x1xf32>
    %148 = arith.select %147, %146, %123 : vector<8x1xi1>, vector<8x1xf32>
    %cst_77 = arith.constant 3.000000e+00 : f32
    %149 = vector.broadcast %cst_77 : f32 to vector<8x1xf32>
    %150 = arith.select %147, %149, %125 : vector<8x1xi1>, vector<8x1xf32>
    %c0_78 = arith.constant 0 : index
    %c0_79 = arith.constant 0 : index
    %151 = vector.load %arg1[%c0_78, %c0_79] : memref<8x32xbf16, #tpu.memory_space<vmem>>, vector<8x32xbf16>
    %c0_80 = arith.constant 0 : index
    %c0_81 = arith.constant 0 : index
    %152 = vector.load %arg18[%c0_80, %c0_81] : memref<32x3xbf16, #tpu.memory_space<vmem>>, vector<32x3xbf16>
    %cst_82 = arith.constant dense<0.000000e+00> : vector<8x3xf32>
    %153 = tpu.matmul %151, %152, %cst_82 {dimension_numbers = #tpu.dot_dimension_numbers<[1], [0], [0], [1], [0, 0, 1, 1], [], []>} : vector<8x32xbf16>, vector<32x3xbf16>, vector<8x3xf32> -> vector<8x3xf32>
    %c0_83 = arith.constant 0 : index
    %c0_84 = arith.constant 0 : index
    %154 = vector.load %arg19[%c0_83, %c0_84] : memref<1x3xf32, #tpu.memory_space<vmem>>, vector<1x3xf32>
    %155 = vector.broadcast %154 : vector<1x3xf32> to vector<8x3xf32>
    %156 = arith.addf %153, %155 : vector<8x3xf32>
    %cst_85 = arith.constant dense<0xFF800000> : vector<8xf32>
    %157 = vector.multi_reduction <maximumf>, %156, %cst_85 [1] : vector<8x3xf32> to vector<8xf32>
    %158 = vector.shape_cast %157 : vector<8xf32> to vector<8x1xf32>
    %159 = vector.broadcast %158 : vector<8x1xf32> to vector<8x3xf32>
    %160 = arith.subf %156, %159 : vector<8x3xf32>
    %161 = math.exp %160 : vector<8x3xf32>
    %cst_86 = arith.constant dense<0.000000e+00> : vector<8xf32>
    %162 = vector.multi_reduction <add>, %161, %cst_86 [1] : vector<8x3xf32> to vector<8xf32>
    %163 = vector.shape_cast %162 : vector<8xf32> to vector<8x1xf32>
    %164 = vector.broadcast %163 : vector<8x1xf32> to vector<8x3xf32>
    %165 = arith.divf %161, %164 : vector<8x3xf32>
    %166 = vector.extract_strided_slice %165 {offsets = [0, 0], sizes = [8, 1], strides = [1, 1]} : vector<8x3xf32> to vector<8x1xf32>
    %167 = vector.extract_strided_slice %46 {offsets = [0, 0], sizes = [8, 1], strides = [1, 1]} : vector<8x2xf32> to vector<8x1xf32>
    %168 = arith.mulf %166, %167 : vector<8x1xf32>
    %169 = vector.extract_strided_slice %165 {offsets = [0, 1], sizes = [8, 1], strides = [1, 1]} : vector<8x3xf32> to vector<8x1xf32>
    %170 = vector.extract_strided_slice %46 {offsets = [0, 1], sizes = [8, 1], strides = [1, 1]} : vector<8x2xf32> to vector<8x1xf32>
    %171 = arith.mulf %169, %170 : vector<8x1xf32>
    %172 = arith.addf %168, %171 : vector<8x1xf32>
    %173 = vector.extract_strided_slice %165 {offsets = [0, 2], sizes = [8, 1], strides = [1, 1]} : vector<8x3xf32> to vector<8x1xf32>
    %174 = arith.mulf %173, %148 : vector<8x1xf32>
    %175 = arith.addf %172, %174 : vector<8x1xf32>
    %cst_87 = arith.constant 0.000000e+00 : f32
    %176 = vector.broadcast %cst_87 : f32 to vector<8x120xf32>
    %177 = tpu.concatenate %175, %165, %46, %148, %150, %176 in 1 : vector<8x1xf32>, vector<8x3xf32>, vector<8x2xf32>, vector<8x1xf32>, vector<8x1xf32>, vector<8x120xf32> -> vector<8x128xf32>
    %c0_88 = arith.constant 0 : index
    %c0_89 = arith.constant 0 : index
    %178 = vector.load %arg23[%c0_88, %c0_89] : memref<8x128xf32, #tpu.memory_space<vmem>>, vector<8x128xf32>
    tpu.vector_store %arg23[%c0_88, %c0_89], %177 {strides = array<i32>} : memref<8x128xf32, #tpu.memory_space<vmem>>, vector<8x128xf32>,
    return
  }
  func.func @transform_0(%arg0: i32) -> (i32, i32) {
    %c0_i32 = arith.constant 0 : i32
    %c0_i32_0 = arith.constant 0 : i32
    return %arg0, %c0_i32 : i32, i32
  }
  func.func @transform_1(%arg0: i32) -> (i32, i32) {
    %c0_i32 = arith.constant 0 : i32
    %c0_i32_0 = arith.constant 0 : i32
    return %arg0, %c0_i32 : i32, i32
  }
  func.func @transform_2(%arg0: i32) -> (i32, i32) {
    %c0_i32 = arith.constant 0 : i32
    %c0_i32_0 = arith.constant 0 : i32
    return %arg0, %c0_i32 : i32, i32
  }
  func.func @transform_3(%arg0: i32) -> (i32, i32) {
    %c0_i32 = arith.constant 0 : i32
    %c0_i32_0 = arith.constant 0 : i32
    return %arg0, %c0_i32 : i32, i32
  }
  func.func @transform_4(%arg0: i32) -> (i32, i32) {
    %c0_i32 = arith.constant 0 : i32
    %c0_i32_0 = arith.constant 0 : i32
    return %arg0, %c0_i32 : i32, i32
  }
  func.func @transform_5(%arg0: i32) -> (i32, i32) {
    %c0_i32 = arith.constant 0 : i32
    %c0_i32_0 = arith.constant 0 : i32
    %c0_i32_1 = arith.constant 0 : i32
    return %c0_i32, %c0_i32_0 : i32, i32
  }
  func.func @transform_6(%arg0: i32) -> (i32, i32) {
    %c0_i32 = arith.constant 0 : i32
    %c0_i32_0 = arith.constant 0 : i32
    %c0_i32_1 = arith.constant 0 : i32
    return %c0_i32, %c0_i32_0 : i32, i32
  }
  func.func @transform_7(%arg0: i32) -> (i32, i32) {
    %c0_i32 = arith.constant 0 : i32
    %c0_i32_0 = arith.constant 0 : i32
    %c0_i32_1 = arith.constant 0 : i32
    return %c0_i32, %c0_i32_0 : i32, i32
  }
  func.func @transform_8(%arg0: i32) -> (i32, i32) {
    %c0_i32 = arith.constant 0 : i32
    %c0_i32_0 = arith.constant 0 : i32
    %c0_i32_1 = arith.constant 0 : i32
    return %c0_i32, %c0_i32_0 : i32, i32
  }
  func.func @transform_9(%arg0: i32) -> (i32, i32) {
    %c0_i32 = arith.constant 0 : i32
    %c0_i32_0 = arith.constant 0 : i32
    %c0_i32_1 = arith.constant 0 : i32
    return %c0_i32, %c0_i32_0 : i32, i32
  }
  func.func @transform_10(%arg0: i32) -> (i32, i32) {
    %c0_i32 = arith.constant 0 : i32
    %c0_i32_0 = arith.constant 0 : i32
    %c0_i32_1 = arith.constant 0 : i32
    return %c0_i32, %c0_i32_0 : i32, i32
  }
  func.func @transform_11(%arg0: i32) -> (i32, i32) {
    %c0_i32 = arith.constant 0 : i32
    %c0_i32_0 = arith.constant 0 : i32
    %c0_i32_1 = arith.constant 0 : i32
    return %c0_i32, %c0_i32_0 : i32, i32
  }
  func.func @transform_12(%arg0: i32) -> (i32, i32) {
    %c0_i32 = arith.constant 0 : i32
    %c0_i32_0 = arith.constant 0 : i32
    %c0_i32_1 = arith.constant 0 : i32
    return %c0_i32, %c0_i32_0 : i32, i32
  }
  func.func @transform_13(%arg0: i32) -> (i32, i32) {
    %c0_i32 = arith.constant 0 : i32
    %c0_i32_0 = arith.constant 0 : i32
    %c0_i32_1 = arith.constant 0 : i32
    return %c0_i32, %c0_i32_0 : i32, i32
  }
  func.func @transform_14(%arg0: i32) -> (i32, i32) {
    %c0_i32 = arith.constant 0 : i32
    %c0_i32_0 = arith.constant 0 : i32
    %c0_i32_1 = arith.constant 0 : i32
    return %c0_i32, %c0_i32_0 : i32, i32
  }
  func.func @transform_15(%arg0: i32) -> (i32, i32) {
    %c0_i32 = arith.constant 0 : i32
    %c0_i32_0 = arith.constant 0 : i32
    %c0_i32_1 = arith.constant 0 : i32
    return %c0_i32, %c0_i32_0 : i32, i32
  }
  func.func @transform_16(%arg0: i32) -> (i32, i32) {
    %c0_i32 = arith.constant 0 : i32
    %c0_i32_0 = arith.constant 0 : i32
    %c0_i32_1 = arith.constant 0 : i32
    return %c0_i32, %c0_i32_0 : i32, i32
  }
  func.func @transform_17(%arg0: i32) -> (i32, i32) {
    %c0_i32 = arith.constant 0 : i32
    %c0_i32_0 = arith.constant 0 : i32
    %c0_i32_1 = arith.constant 0 : i32
    return %c0_i32, %c0_i32_0 : i32, i32
  }
  func.func @transform_18(%arg0: i32) -> (i32, i32) {
    %c0_i32 = arith.constant 0 : i32
    %c0_i32_0 = arith.constant 0 : i32
    %c0_i32_1 = arith.constant 0 : i32
    return %c0_i32, %c0_i32_0 : i32, i32
  }
  func.func @transform_19(%arg0: i32) -> (i32, i32) {
    %c0_i32 = arith.constant 0 : i32
    %c0_i32_0 = arith.constant 0 : i32
    %c0_i32_1 = arith.constant 0 : i32
    return %c0_i32, %c0_i32_0 : i32, i32
  }
  func.func @transform_20(%arg0: i32) -> (i32, i32) {
    %c0_i32 = arith.constant 0 : i32
    %c0_i32_0 = arith.constant 0 : i32
    %c0_i32_1 = arith.constant 0 : i32
    return %c0_i32, %c0_i32_0 : i32, i32
  }
  func.func @transform_21(%arg0: i32) -> (i32, i32) {
    %c0_i32 = arith.constant 0 : i32
    %c0_i32_0 = arith.constant 0 : i32
    %c0_i32_1 = arith.constant 0 : i32
    return %c0_i32, %c0_i32_0 : i32, i32
  }
  func.func @transform_22(%arg0: i32) -> (i32, i32) {
    %c0_i32 = arith.constant 0 : i32
    %c0_i32_0 = arith.constant 0 : i32
    return %arg0, %c0_i32 : i32, i32
  }
}

</mosaic_0001>

<llo_original>
// kernel: joint_matching_forward.1
$region0: #{joint_matching_forward.1}
  #allocation0 [shape = 'u32[]', space=smem, size = 0x4, offset = 0x4, fixed_abs, tag = 'smem constant byte address 0x4 - core index']
  #allocation1 [shape = 'u32[144,128]{1,0:T(1,128)}', space=vmem, size = 0x12000, scoped, tag = 'internal scratch']
  %s0 = inlined_call_operand.vmem [shape: bf16[8,32], index: 0, kind: input, shape index: {}]
  %s1 = inlined_call_operand.vmem [shape: bf16[8,48], index: 1, kind: input, shape index: {}]
  %s2 = inlined_call_operand.vmem [shape: bf16[8,72], index: 2, kind: input, shape index: {}]
  %s3 = inlined_call_operand.vmem [shape: bf16[8,128], index: 3, kind: input, shape index: {}]
  %s4 = inlined_call_operand.vmem [shape: f32[8,4], index: 4, kind: input, shape index: {}]
  %s5 = inlined_call_operand.vmem [shape: bf16[48,96], index: 5, kind: input, shape index: {}]
  %s6 = inlined_call_operand.vmem [shape: f32[1,96], index: 6, kind: input, shape index: {}]
  %s7 = inlined_call_operand.vmem [shape: bf16[96,96], index: 7, kind: input, shape index: {}]
  %s8 = inlined_call_operand.vmem [shape: f32[1,96], index: 8, kind: input, shape index: {}]
  %s9 = inlined_call_operand.vmem [shape: bf16[72,64], index: 9, kind: input, shape index: {}]
  %s10 = inlined_call_operand.vmem [shape: f32[1,64], index: 10, kind: input, shape index: {}]
  %s11 = inlined_call_operand.vmem [shape: bf16[64,64], index: 11, kind: input, shape index: {}]
  %s12 = inlined_call_operand.vmem [shape: f32[1,64], index: 12, kind: input, shape index: {}]
  %s13 = inlined_call_operand.vmem [shape: bf16[32,32], index: 13, kind: input, shape index: {}]
  %s14 = inlined_call_operand.vmem [shape: f32[1,32], index: 14, kind: input, shape index: {}]
  %s15 = inlined_call_operand.vmem [shape: bf16[32,32], index: 15, kind: input, shape index: {}]
  %s16 = inlined_call_operand.vmem [shape: f32[1,32], index: 16, kind: input, shape index: {}]
  %s17 = inlined_call_operand.vmem [shape: bf16[32,3], index: 17, kind: input, shape index: {}]
  %s18 = inlined_call_operand.vmem [shape: f32[1,3], index: 18, kind: input, shape index: {}]
  %s19 = inlined_call_operand.vmem [shape: f32[96,3], index: 19, kind: input, shape index: {}]
  %s20 = inlined_call_operand.vmem [shape: f32[64,2], index: 20, kind: input, shape index: {}]
  %s21 = inlined_call_operand.vmem [shape: f32[32,1], index: 21, kind: input, shape index: {}]
  %s22 = inlined_call_operand.vmem [shape: f32[8,128], index: 22, kind: output, shape index: {}]
  %s23 = sld [smem:[#allocation0]]
  $region98: #{joint_matching_forward.1} parent=0
    _
  %s25 = ssub.s32 1, %s23
  %s26 = scalar_select 0, %s25, %s23
  // Predicated region
  $region2: #{joint_matching_forward.1} parent=0 // pred_check
    _
  $region3: #{joint_matching_forward.1} parent=0 // pred_check_branch
    %28 = sbr.rel (0) target = $region5
  $region4: #{joint_matching_forward.1} parent=0 // pred_region
    _
  $region5: #{joint_matching_forward.1} parent=0 // pred_fallthru
    _
  // Predicated region
  $region6: #{joint_matching_forward.1} parent=0 // pred_check
    _
  $region7: #{joint_matching_forward.1} parent=0 // pred_check_branch
    %30 = sbr.rel (0) target = $region9
  $region8: #{joint_matching_forward.1} parent=0 // pred_region
    _
  $region9: #{joint_matching_forward.1} parent=0 // pred_fallthru
    _
  // Predicated region
  $region10: #{joint_matching_forward.1} parent=0 // pred_check
    _
  $region11: #{joint_matching_forward.1} parent=0 // pred_check_branch
    %32 = sbr.rel (0) target = $region13
  $region12: #{joint_matching_forward.1} parent=0 // pred_region
    _
  $region13: #{joint_matching_forward.1} parent=0 // pred_fallthru
    _
  // Predicated region
  $region14: #{joint_matching_forward.1} parent=0 // pred_check
    _
  $region15: #{joint_matching_forward.1} parent=0 // pred_check_branch
    %34 = sbr.rel (0) target = $region17
  $region16: #{joint_matching_forward.1} parent=0 // pred_region
    _
  $region17: #{joint_matching_forward.1} parent=0 // pred_fallthru
    _
  // Predicated region
  $region18: #{joint_matching_forward.1} parent=0 // pred_check
    _
  $region19: #{joint_matching_forward.1} parent=0 // pred_check_branch
    %36 = sbr.rel (0) target = $region21
  $region20: #{joint_matching_forward.1} parent=0 // pred_region
    _
  $region21: #{joint_matching_forward.1} parent=0 // pred_fallthru
    _
  // Predicated region
  $region22: #{joint_matching_forward.1} parent=0 // pred_check
    _
  $region23: #{joint_matching_forward.1} parent=0 // pred_check_branch
    %38 = sbr.rel (0) target = $region25
  $region24: #{joint_matching_forward.1} parent=0 // pred_region
    _
  $region25: #{joint_matching_forward.1} parent=0 // pred_fallthru
    _
  // Predicated region
  $region26: #{joint_matching_forward.1} parent=0 // pred_check
    _
  $region27: #{joint_matching_forward.1} parent=0 // pred_check_branch
    %40 = sbr.rel (0) target = $region29
  $region28: #{joint_matching_forward.1} parent=0 // pred_region
    _
  $region29: #{joint_matching_forward.1} parent=0 // pred_fallthru
    _
  // Predicated region
  $region30: #{joint_matching_forward.1} parent=0 // pred_check
    _
  $region31: #{joint_matching_forward.1} parent=0 // pred_check_branch
    %42 = sbr.rel (0) target = $region33
  $region32: #{joint_matching_forward.1} parent=0 // pred_region
    _
  $region33: #{joint_matching_forward.1} parent=0 // pred_fallthru
    _
  // Predicated region
  $region34: #{joint_matching_forward.1} parent=0 // pred_check
    _
  $region35: #{joint_matching_forward.1} parent=0 // pred_check_branch
    %44 = sbr.rel (0) target = $region37
  $region36: #{joint_matching_forward.1} parent=0 // pred_region
    _
  $region37: #{joint_matching_forward.1} parent=0 // pred_fallthru
    _
  // Predicated region
  $region38: #{joint_matching_forward.1} parent=0 // pred_check
    _
  $region39: #{joint_matching_forward.1} parent=0 // pred_check_branch
    %46 = sbr.rel (0) target = $region41
  $region40: #{joint_matching_forward.1} parent=0 // pred_region
    _
  $region41: #{joint_matching_forward.1} parent=0 // pred_fallthru
    _
  // Predicated region
  $region42: #{joint_matching_forward.1} parent=0 // pred_check
    _
  $region43: #{joint_matching_forward.1} parent=0 // pred_check_branch
    %48 = sbr.rel (0) target = $region45
  $region44: #{joint_matching_forward.1} parent=0 // pred_region
    _
  $region45: #{joint_matching_forward.1} parent=0 // pred_fallthru
    _
  // Predicated region
  $region46: #{joint_matching_forward.1} parent=0 // pred_check
    _
  $region47: #{joint_matching_forward.1} parent=0 // pred_check_branch
    %50 = sbr.rel (0) target = $region49
  $region48: #{joint_matching_forward.1} parent=0 // pred_region
    _
  $region49: #{joint_matching_forward.1} parent=0 // pred_fallthru
    _
  // Predicated region
  $region50: #{joint_matching_forward.1} parent=0 // pred_check
    _
  $region51: #{joint_matching_forward.1} parent=0 // pred_check_branch
    %52 = sbr.rel (0) target = $region53
  $region52: #{joint_matching_forward.1} parent=0 // pred_region
    _
  $region53: #{joint_matching_forward.1} parent=0 // pred_fallthru
    _
  // Predicated region
  $region54: #{joint_matching_forward.1} parent=0 // pred_check
    _
  $region55: #{joint_matching_forward.1} parent=0 // pred_check_branch
    %54 = sbr.rel (0) target = $region57
  $region56: #{joint_matching_forward.1} parent=0 // pred_region
    _
  $region57: #{joint_matching_forward.1} parent=0 // pred_fallthru
    _
  // Predicated region
  $region58: #{joint_matching_forward.1} parent=0 // pred_check
    _
  $region59: #{joint_matching_forward.1} parent=0 // pred_check_branch
    %56 = sbr.rel (0) target = $region61
  $region60: #{joint_matching_forward.1} parent=0 // pred_region
    _
  $region61: #{joint_matching_forward.1} parent=0 // pred_fallthru
    _
  // Predicated region
  $region62: #{joint_matching_forward.1} parent=0 // pred_check
    _
  $region63: #{joint_matching_forward.1} parent=0 // pred_check_branch
    %58 = sbr.rel (0) target = $region65
  $region64: #{joint_matching_forward.1} parent=0 // pred_region
    _
  $region65: #{joint_matching_forward.1} parent=0 // pred_fallthru
    _
  // Predicated region
  $region66: #{joint_matching_forward.1} parent=0 // pred_check
    _
  $region67: #{joint_matching_forward.1} parent=0 // pred_check_branch
    %60 = sbr.rel (0) target = $region69
  $region68: #{joint_matching_forward.1} parent=0 // pred_region
    _
  $region69: #{joint_matching_forward.1} parent=0 // pred_fallthru
    _
  // Predicated region
  $region70: #{joint_matching_forward.1} parent=0 // pred_check
    _
  $region71: #{joint_matching_forward.1} parent=0 // pred_check_branch
    %62 = sbr.rel (0) target = $region73
  $region72: #{joint_matching_forward.1} parent=0 // pred_region
    _
  $region73: #{joint_matching_forward.1} parent=0 // pred_fallthru
    _
  // Predicated region
  $region74: #{joint_matching_forward.1} parent=0 // pred_check
    _
  $region75: #{joint_matching_forward.1} parent=0 // pred_check_branch
    %64 = sbr.rel (0) target = $region77
  $region76: #{joint_matching_forward.1} parent=0 // pred_region
    _
  $region77: #{joint_matching_forward.1} parent=0 // pred_fallthru
    _
  // Predicated region
  $region78: #{joint_matching_forward.1} parent=0 // pred_check
    _
  $region79: #{joint_matching_forward.1} parent=0 // pred_check_branch
    %66 = sbr.rel (0) target = $region81
  $region80: #{joint_matching_forward.1} parent=0 // pred_region
    _
  $region81: #{joint_matching_forward.1} parent=0 // pred_fallthru
    _
  // Predicated region
  $region82: #{joint_matching_forward.1} parent=0 // pred_check
    _
  $region83: #{joint_matching_forward.1} parent=0 // pred_check_branch
    %68 = sbr.rel (0) target = $region85
  $region84: #{joint_matching_forward.1} parent=0 // pred_region
    _
  $region85: #{joint_matching_forward.1} parent=0 // pred_fallthru
    _
  // Predicated region
  $region86: #{joint_matching_forward.1} parent=0 // pred_check
    _
  $region87: #{joint_matching_forward.1} parent=0 // pred_check_branch
    %70 = sbr.rel (0) target = $region89
  $region88: #{joint_matching_forward.1} parent=0 // pred_region
    _
  $region89: #{joint_matching_forward.1} parent=0 // pred_fallthru
    _
  %v72 = vld [vmem:[%s1] sm:$0xf]
  %v73 = vld [vmem:[%s5] sm:$0xf]
  %v74 = vld [vmem:[%s5 + $0x4] sm:$0xf]
  %v75 = vld [vmem:[%s5 + $0x8] sm:$0xf]
  %v76 = vld [vmem:[%s5 + $0xc] sm:$0xf]
  %v77 = vld [vmem:[%s5 + $0x10] sm:$0xf]
  %v78 = vld [vmem:[%s5 + $0x14] sm:$0xf]
  %v79 = vld [vmem:[%s6] sm:$0x1]
  %v80 = vld [vmem:[%s7] sm:$0xf]
  %v81 = vld [vmem:[%s7 + $0x4] sm:$0xf]
  %v82 = vld [vmem:[%s7 + $0x8] sm:$0xf]
  %v83 = vld [vmem:[%s7 + $0xc] sm:$0xf]
  %v84 = vld [vmem:[%s7 + $0x10] sm:$0xf]
  %v85 = vld [vmem:[%s7 + $0x14] sm:$0xf]
  %v86 = vld [vmem:[%s7 + $0x18] sm:$0xf]
  %v87 = vld [vmem:[%s7 + $0x1c] sm:$0xf]
  %v88 = vld [vmem:[%s7 + $0x20] sm:$0xf]
  %v89 = vld [vmem:[%s7 + $0x24] sm:$0xf]
  %v90 = vld [vmem:[%s7 + $0x28] sm:$0xf]
  %v91 = vld [vmem:[%s7 + $0x2c] sm:$0xf]
  %v92 = vld [vmem:[%s8] sm:$0x1]
  %v94 = vlaneseq
  %v95 = vshrl.u32 %v94, 7
  %v96 = vsub.s32 0, %v95
  %v97 = vrot.slane %v79, %v96
  %v105 = vunpack.c.l.b16 %v73
  %v106 = vunpack.c.l.b16 %v74
  %v107 = vunpack.c.l.b16 %v75
  %v108 = vunpack.c.l.b16 %v76
  %v109 = vunpack.c.l.b16 %v77
  %v110 = vunpack.c.l.b16 %v78
  %v111 = vpack.c.b16 %v106, %v105
  %v112 = vpack.c.b16 %v108, %v107
  %v113 = vpack.c.b16 %v110, %v109
  %vm117 = vcmask 392192
  %v119 = vsel %vm117, %v72, 0
  %121 = vmatprep.subr.bf16.mxu0 0
  %122 = vmatpush1.bf16.msra.mxu0 %v111
  %123 = vmatprep.subr.bf16.mxu0 0
  %124 = vmatpush1.bf16.msra.mxu0 %v112
  %125 = vmatprep.subr.bf16.mxu0 0
  %126 = vmatpush1.bf16.msra.mxu0 %v113
  %127 = vmatprep.subr.bf16.mxu0 0
  %128 = vmatpush1.bf16.msra.mxu0 0
  %129 = vmatprep.subr.bf16.mxu0 0
  %130 = vmatpush1.bf16.msra.mxu0 0
  %131 = vmatprep.subr.bf16.mxu0 0
  %132 = vmatpush1.bf16.msra.mxu0 0
  %133 = vmatprep.subr.bf16.mxu0 0
  %134 = vmatpush1.bf16.msra.mxu0 0
  %135 = vmatprep.subr.bf16.mxu0 0
  %136 = vmatpush1.bf16.msra.mxu0 0
  %137 = vmatprep.subr.bf16.mxu0 0
  %138 = vmatpush1.bf16.msra.mxu0 0
  %139 = vmatprep.subr.bf16.mxu0 0
  %140 = vmatpush1.bf16.msra.mxu0 0
  %141 = vmatprep.subr.bf16.mxu0 0
  %142 = vmatpush1.bf16.msra.mxu0 0
  %143 = vmatprep.subr.bf16.mxu0 0
  %144 = vmatpush1.bf16.msra.mxu0 0
  %145 = vmatprep.subr.bf16.mxu0 0
  %146 = vmatpush1.bf16.msra.mxu0 0
  %147 = vmatprep.subr.bf16.mxu0 0
  %148 = vmatpush1.bf16.msra.mxu0 0
  %149 = vmatprep.subr.bf16.mxu0 0
  %150 = vmatpush1.bf16.msra.mxu0 0
  %151 = vmatprep.subr.bf16.mxu0 0
  %152 = vmatpush1.bf16.msra.mxu0 0
  %153 = vmatprep.mubr.bf16.mxu0 0
  %154 = vmatmul.mubr.bf16.gmra.mrb[0].mxu0 %v119
  %v155 = vpop.f32.mrb[0].mxu0
  %v156 = vadd.f32 %v97, %v155
  %v157 = vpop.f32.mrb[0].mxu0
  %v158 = vpop.f32.mrb[0].mxu0
  %v159 = vpop.f32.mrb[0].mxu0
  %160 = vdwg.mxu0
  %v161 = vmax.f32 %v156, 0.0
  %v162 = vpack.c.bf16 %v161, %v161
  %v164 = vlaneseq
  %v165 = vshrl.u32 %v164, 7
  %v166 = vsub.s32 0, %v165
  %v167 = vrot.slane %v92, %v166
  %v181 = vunpack.c.l.b16 %v80
  %v182 = vunpack.c.l.b16 %v81
  %v183 = vunpack.c.l.b16 %v82
  %v184 = vunpack.c.l.b16 %v83
  %v185 = vunpack.c.l.b16 %v84
  %v186 = vunpack.c.l.b16 %v85
  %v187 = vunpack.c.l.b16 %v86
  %v188 = vunpack.c.l.b16 %v87
  %v189 = vunpack.c.l.b16 %v88
  %v190 = vunpack.c.l.b16 %v89
  %v191 = vunpack.c.l.b16 %v90
  %v192 = vunpack.c.l.b16 %v91
  %v193 = vpack.c.b16 %v182, %v181
  %v194 = vpack.c.b16 %v184, %v183
  %v195 = vpack.c.b16 %v186, %v185
  %v196 = vpack.c.b16 %v188, %v187
  %v197 = vpack.c.b16 %v190, %v189
  %v198 = vpack.c.b16 %v192, %v191
  %vm205 = vcmask 785408
  %v207 = vsel %vm205, %v162, 0
  %209 = vmatprep.subr.bf16.mxu0 0
  %210 = vmatpush1.bf16.msra.mxu0 %v193
  %211 = vmatprep.subr.bf16.mxu0 0
  %212 = vmatpush1.bf16.msra.mxu0 %v194
  %213 = vmatprep.subr.bf16.mxu0 0
  %214 = vmatpush1.bf16.msra.mxu0 %v195
  %215 = vmatprep.subr.bf16.mxu0 0
  %216 = vmatpush1.bf16.msra.mxu0 %v196
  %217 = vmatprep.subr.bf16.mxu0 0
  %218 = vmatpush1.bf16.msra.mxu0 %v197
  %219 = vmatprep.subr.bf16.mxu0 0
  %220 = vmatpush1.bf16.msra.mxu0 %v198
  %221 = vmatprep.subr.bf16.mxu0 0
  %222 = vmatpush1.bf16.msra.mxu0 0
  %223 = vmatprep.subr.bf16.mxu0 0
  %224 = vmatpush1.bf16.msra.mxu0 0
  %225 = vmatprep.subr.bf16.mxu0 0
  %226 = vmatpush1.bf16.msra.mxu0 0
  %227 = vmatprep.subr.bf16.mxu0 0
  %228 = vmatpush1.bf16.msra.mxu0 0
  %229 = vmatprep.subr.bf16.mxu0 0
  %230 = vmatpush1.bf16.msra.mxu0 0
  %231 = vmatprep.subr.bf16.mxu0 0
  %232 = vmatpush1.bf16.msra.mxu0 0
  %233 = vmatprep.subr.bf16.mxu0 0
  %234 = vmatpush1.bf16.msra.mxu0 0
  %235 = vmatprep.subr.bf16.mxu0 0
  %236 = vmatpush1.bf16.msra.mxu0 0
  %237 = vmatprep.subr.bf16.mxu0 0
  %238 = vmatpush1.bf16.msra.mxu0 0
  %239 = vmatprep.subr.bf16.mxu0 0
  %240 = vmatpush1.bf16.msra.mxu0 0
  %241 = vmatprep.mubr.bf16.mxu0 0
  %242 = vmatmul.mubr.bf16.gmra.mrb[0].mxu0 %v207
  %v243 = vpop.f32.mrb[0].mxu0
  %v244 = vadd.f32 %v167, %v243
  %v245 = vpop.f32.mrb[0].mxu0
  %v246 = vpop.f32.mrb[0].mxu0
  %v247 = vpop.f32.mrb[0].mxu0
  %248 = vdwg.mxu0
  %v249 = vld [vmem:[%s2] sm:$0xf]
  %v250 = vld [vmem:[%s9] sm:$0xf]
  %v251 = vld [vmem:[%s9 + $0x4] sm:$0xf]
  %v252 = vld [vmem:[%s9 + $0x8] sm:$0xf]
  %v253 = vld [vmem:[%s9 + $0xc] sm:$0xf]
  %v254 = vld [vmem:[%s9 + $0x10] sm:$0xf]
  %v255 = vld [vmem:[%s9 + $0x14] sm:$0xf]
  %v256 = vld [vmem:[%s9 + $0x18] sm:$0xf]
  %v257 = vld [vmem:[%s9 + $0x1c] sm:$0xf]
  %v258 = vld [vmem:[%s9 + $0x20] sm:$0xf]
  %v259 = vld [vmem:[%s10] sm:$0x1]
  %v260 = vld [vmem:[%s11] sm:$0xf]
  %v261 = vld [vmem:[%s11 + $0x4] sm:$0xf]
  %v262 = vld [vmem:[%s11 + $0x8] sm:$0xf]
  %v263 = vld [vmem:[%s11 + $0xc] sm:$0xf]
  %v264 = vld [vmem:[%s11 + $0x10] sm:$0xf]
  %v265 = vld [vmem:[%s11 + $0x14] sm:$0xf]
  %v266 = vld [vmem:[%s11 + $0x18] sm:$0xf]
  %v267 = vld [vmem:[%s11 + $0x1c] sm:$0xf]
  %v268 = vld [vmem:[%s12] sm:$0x1]
  %v270 = vlaneseq
  %v271 = vshrl.u32 %v270, 7
  %v272 = vsub.s32 0, %v271
  %v273 = vrot.slane %v259, %v272
  %v284 = vunpack.c.l.b16 %v250
  %v285 = vunpack.c.l.b16 %v251
  %v286 = vunpack.c.l.b16 %v252
  %v287 = vunpack.c.l.b16 %v253
  %v288 = vunpack.c.l.b16 %v254
  %v289 = vunpack.c.l.b16 %v255
  %v290 = vunpack.c.l.b16 %v256
  %v291 = vunpack.c.l.b16 %v257
  %v292 = vunpack.c.l.b16 %v258
  %v293 = vpack.c.b16 %v285, %v284
  %v294 = vpack.c.b16 %v287, %v286
  %v295 = vpack.c.b16 %v289, %v288
  %v296 = vpack.c.b16 %v291, %v290
  %v297 = vpack.c.b16 %v292, %v292
  %vm302 = vcmask 588800
  %v304 = vsel %vm302, %v249, 0
  %vm306 = vcmask 1043456
  %v308 = vsel %vm306, %v297, 0
  %310 = vmatprep.subr.bf16.mxu0 0
  %311 = vmatpush1.bf16.msra.mxu0 %v293
  %312 = vmatprep.subr.bf16.mxu0 0
  %313 = vmatpush1.bf16.msra.mxu0 %v294
  %314 = vmatprep.subr.bf16.mxu0 0
  %315 = vmatpush1.bf16.msra.mxu0 %v295
  %316 = vmatprep.subr.bf16.mxu0 0
  %317 = vmatpush1.bf16.msra.mxu0 %v296
  %318 = vmatprep.subr.bf16.mxu0 0
  %319 = vmatpush1.bf16.msra.mxu0 %v308
  %320 = vmatprep.subr.bf16.mxu0 0
  %321 = vmatpush1.bf16.msra.mxu0 0
  %322 = vmatprep.subr.bf16.mxu0 0
  %323 = vmatpush1.bf16.msra.mxu0 0
  %324 = vmatprep.subr.bf16.mxu0 0
  %325 = vmatpush1.bf16.msra.mxu0 0
  %326 = vmatprep.subr.bf16.mxu0 0
  %327 = vmatpush1.bf16.msra.mxu0 0
  %328 = vmatprep.subr.bf16.mxu0 0
  %329 = vmatpush1.bf16.msra.mxu0 0
  %330 = vmatprep.subr.bf16.mxu0 0
  %331 = vmatpush1.bf16.msra.mxu0 0
  %332 = vmatprep.subr.bf16.mxu0 0
  %333 = vmatpush1.bf16.msra.mxu0 0
  %334 = vmatprep.subr.bf16.mxu0 0
  %335 = vmatpush1.bf16.msra.mxu0 0
  %336 = vmatprep.subr.bf16.mxu0 0
  %337 = vmatpush1.bf16.msra.mxu0 0
  %338 = vmatprep.subr.bf16.mxu0 0
  %339 = vmatpush1.bf16.msra.mxu0 0
  %340 = vmatprep.subr.bf16.mxu0 0
  %341 = vmatpush1.bf16.msra.mxu0 0
  %342 = vmatprep.mubr.bf16.mxu0 0
  %343 = vmatmul.mubr.bf16.gmra.mrb[0].mxu0 %v304
  %v344 = vpop.f32.mrb[0].mxu0
  %v345 = vadd.f32 %v273, %v344
  %v346 = vpop.f32.mrb[0].mxu0
  %v347 = vpop.f32.mrb[0].mxu0
  %v348 = vpop.f32.mrb[0].mxu0
  %349 = vdwg.mxu0
  %v350 = vmax.f32 %v345, 0.0
  %v351 = vpack.c.bf16 %v350, %v350
  %v353 = vlaneseq
  %v354 = vshrl.u32 %v353, 7
  %v355 = vsub.s32 0, %v354
  %v356 = vrot.slane %v268, %v355
  %v366 = vunpack.c.l.b16 %v260
  %v367 = vunpack.c.l.b16 %v261
  %v368 = vunpack.c.l.b16 %v262
  %v369 = vunpack.c.l.b16 %v263
  %v370 = vunpack.c.l.b16 %v264
  %v371 = vunpack.c.l.b16 %v265
  %v372 = vunpack.c.l.b16 %v266
  %v373 = vunpack.c.l.b16 %v267
  %v374 = vpack.c.b16 %v367, %v366
  %v375 = vpack.c.b16 %v369, %v368
  %v376 = vpack.c.b16 %v371, %v370
  %v377 = vpack.c.b16 %v373, %v372
  %vm382 = vcmask 523264
  %v384 = vsel %vm382, %v351, 0
  %386 = vmatprep.subr.bf16.mxu0 0
  %387 = vmatpush1.bf16.msra.mxu0 %v374
  %388 = vmatprep.subr.bf16.mxu0 0
  %389 = vmatpush1.bf16.msra.mxu0 %v375
  %390 = vmatprep.subr.bf16.mxu0 0
  %391 = vmatpush1.bf16.msra.mxu0 %v376
  %392 = vmatprep.subr.bf16.mxu0 0
  %393 = vmatpush1.bf16.msra.mxu0 %v377
  %394 = vmatprep.subr.bf16.mxu0 0
  %395 = vmatpush1.bf16.msra.mxu0 0
  %396 = vmatprep.subr.bf16.mxu0 0
  %397 = vmatpush1.bf16.msra.mxu0 0
  %398 = vmatprep.subr.bf16.mxu0 0
  %399 = vmatpush1.bf16.msra.mxu0 0
  %400 = vmatprep.subr.bf16.mxu0 0
  %401 = vmatpush1.bf16.msra.mxu0 0
  %402 = vmatprep.subr.bf16.mxu0 0
  %403 = vmatpush1.bf16.msra.mxu0 0
  %404 = vmatprep.subr.bf16.mxu0 0
  %405 = vmatpush1.bf16.msra.mxu0 0
  %406 = vmatprep.subr.bf16.mxu0 0
  %407 = vmatpush1.bf16.msra.mxu0 0
  %408 = vmatprep.subr.bf16.mxu0 0
  %409 = vmatpush1.bf16.msra.mxu0 0
  %410 = vmatprep.subr.bf16.mxu0 0
  %411 = vmatpush1.bf16.msra.mxu0 0
  %412 = vmatprep.subr.bf16.mxu0 0
  %413 = vmatpush1.bf16.msra.mxu0 0
  %414 = vmatprep.subr.bf16.mxu0 0
  %415 = vmatpush1.bf16.msra.mxu0 0
  %416 = vmatprep.subr.bf16.mxu0 0
  %417 = vmatpush1.bf16.msra.mxu0 0
  %418 = vmatprep.mubr.bf16.mxu0 0
  %419 = vmatmul.mubr.bf16.gmra.mrb[0].mxu0 %v384
  %v420 = vpop.f32.mrb[0].mxu0
  %v421 = vadd.f32 %v356, %v420
  %v422 = vpop.f32.mrb[0].mxu0
  %v423 = vpop.f32.mrb[0].mxu0
  %v424 = vpop.f32.mrb[0].mxu0
  %425 = vdwg.mxu0
  %v426 = vld [vmem:[%s19] sm:$0xff]
  %v427 = vld [vmem:[%s19 + $0x8] sm:$0xff]
  %v428 = vld [vmem:[%s19 + $0x10] sm:$0xff]
  %v429 = vld [vmem:[%s19 + $0x18] sm:$0xff]
  %v430 = vld [vmem:[%s19 + $0x20] sm:$0xff]
  %v431 = vld [vmem:[%s19 + $0x28] sm:$0xff]
  %v432 = vld [vmem:[%s19 + $0x30] sm:$0xff]
  %v433 = vld [vmem:[%s19 + $0x38] sm:$0xff]
  %v434 = vld [vmem:[%s19 + $0x40] sm:$0xff]
  %v435 = vld [vmem:[%s19 + $0x48] sm:$0xff]
  %v436 = vld [vmem:[%s19 + $0x50] sm:$0xff]
  %v437 = vld [vmem:[%s19 + $0x58] sm:$0xff]
  %v438 = vld [vmem:[%s20] sm:$0xff]
  %v439 = vld [vmem:[%s20 + $0x8] sm:$0xff]
  %v440 = vld [vmem:[%s20 + $0x10] sm:$0xff]
  %v441 = vld [vmem:[%s20 + $0x18] sm:$0xff]
  %v442 = vld [vmem:[%s20 + $0x20] sm:$0xff]
  %v443 = vld [vmem:[%s20 + $0x28] sm:$0xff]
  %v444 = vld [vmem:[%s20 + $0x30] sm:$0xff]
  %v445 = vld [vmem:[%s20 + $0x38] sm:$0xff]
  %v446 = vld [vmem:[%s21] sm:$0xff]
  %v447 = vld [vmem:[%s21 + $0x8] sm:$0xff]
  %v448 = vld [vmem:[%s21 + $0x10] sm:$0xff]
  %v449 = vld [vmem:[%s21 + $0x18] sm:$0xff]
  %v450 = vmul.f32 %v244, %v244
  %v452 = vsel %vm205, %v450, 0
  %454 = vmatprep.subr.mxu0 0.0
  %455 = vmatpush1.msra.mxu0 %v426
  %456 = vmatprep.subr.mxu0 0.0
  %457 = vmatpush1.msra.mxu0 %v427
  %458 = vmatprep.subr.mxu0 0.0
  %459 = vmatpush1.msra.mxu0 %v428
  %460 = vmatprep.subr.mxu0 0.0
  %461 = vmatpush1.msra.mxu0 %v429
  %462 = vmatprep.subr.mxu0 0.0
  %463 = vmatpush1.msra.mxu0 %v430
  %464 = vmatprep.subr.mxu0 0.0
  %465 = vmatpush1.msra.mxu0 %v431
  %466 = vmatprep.subr.mxu0 0.0
  %467 = vmatpush1.msra.mxu0 %v432
  %468 = vmatprep.subr.mxu0 0.0
  %469 = vmatpush1.msra.mxu0 %v433
  %470 = vmatprep.subr.mxu0 0.0
  %471 = vmatpush1.msra.mxu0 %v434
  %472 = vmatprep.subr.mxu0 0.0
  %473 = vmatpush1.msra.mxu0 %v435
  %474 = vmatprep.subr.mxu0 0.0
  %475 = vmatpush1.msra.mxu0 %v436
  %476 = vmatprep.subr.mxu0 0.0
  %477 = vmatpush1.msra.mxu0 %v437
  %478 = vmatprep.subr.mxu0 0.0
  %479 = vmatpush1.msra.mxu0 0.0
  %480 = vmatprep.subr.mxu0 0.0
  %481 = vmatpush1.msra.mxu0 0.0
  %482 = vmatprep.subr.mxu0 0.0
  %483 = vmatpush1.msra.mxu0 0.0
  %484 = vmatprep.subr.mxu0 0.0
  %485 = vmatpush1.msra.mxu0 0.0
  %486 = vmatprep.subr.mxu0 0.0
  %487 = vmatpush1.msra.mxu0 0.0
  %488 = vmatprep.subr.mxu0 0.0
  %489 = vmatpush1.msra.mxu0 0.0
  %490 = vmatprep.subr.mxu0 0.0
  %491 = vmatpush1.msra.mxu0 0.0
  %492 = vmatprep.subr.mxu0 0.0
  %493 = vmatpush1.msra.mxu0 0.0
  %494 = vmatprep.subr.mxu0 0.0
  %495 = vmatpush1.msra.mxu0 0.0
  %496 = vmatprep.subr.mxu0 0.0
  %497 = vmatpush1.msra.mxu0 0.0
  %498 = vmatprep.subr.mxu0 0.0
  %499 = vmatpush1.msra.mxu0 0.0
  %500 = vmatprep.subr.mxu0 0.0
  %501 = vmatpush1.msra.mxu0 0.0
  %502 = vmatprep.subr.mxu0 0.0
  %503 = vmatpush1.msra.mxu0 0.0
  %504 = vmatprep.subr.mxu0 0.0
  %505 = vmatpush1.msra.mxu0 0.0
  %506 = vmatprep.subr.mxu0 0.0
  %507 = vmatpush1.msra.mxu0 0.0
  %508 = vmatprep.subr.mxu0 0.0
  %509 = vmatpush1.msra.mxu0 0.0
  %510 = vmatprep.subr.mxu0 0.0
  %511 = vmatpush1.msra.mxu0 0.0
  %512 = vmatprep.subr.mxu0 0.0
  %513 = vmatpush1.msra.mxu0 0.0
  %514 = vmatprep.subr.mxu0 0.0
  %515 = vmatpush1.msra.mxu0 0.0
  %516 = vmatprep.subr.mxu0 0.0
  %517 = vmatpush1.msra.mxu0 0.0
  %518 = vmatprep.mubr.f32.mxu0 0.0
  %519 = vmatmul.mubr.f32.gmra.mrb[0].mxu0 %v452
  %v520 = vpop.f32.mrb[0].mxu0
  %v521 = vadd.f32 0.0, %v520
  %v522 = vpop.f32.mrb[0].mxu0
  %523 = vdwg.mxu0
  %v524 = vmax.f32 %v521, 1e-24
  %v525 = vrsqrt.pop %v524
  %v526 = vmul.f32 %v421, %v244
  %v528 = vsel %vm382, %v526, 0
  %530 = vmatprep.subr.mxu0 0.0
  %531 = vmatpush1.msra.mxu0 %v438
  %532 = vmatprep.subr.mxu0 0.0
  %533 = vmatpush1.msra.mxu0 %v439
  %534 = vmatprep.subr.mxu0 0.0
  %535 = vmatpush1.msra.mxu0 %v440
  %536 = vmatprep.subr.mxu0 0.0
  %537 = vmatpush1.msra.mxu0 %v441
  %538 = vmatprep.subr.mxu0 0.0
  %539 = vmatpush1.msra.mxu0 %v442
  %540 = vmatprep.subr.mxu0 0.0
  %541 = vmatpush1.msra.mxu0 %v443
  %542 = vmatprep.subr.mxu0 0.0
  %543 = vmatpush1.msra.mxu0 %v444
  %544 = vmatprep.subr.mxu0 0.0
  %545 = vmatpush1.msra.mxu0 %v445
  %546 = vmatprep.subr.mxu0 0.0
  %547 = vmatpush1.msra.mxu0 0.0
  %548 = vmatprep.subr.mxu0 0.0
  %549 = vmatpush1.msra.mxu0 0.0
  %550 = vmatprep.subr.mxu0 0.0
  %551 = vmatpush1.msra.mxu0 0.0
  %552 = vmatprep.subr.mxu0 0.0
  %553 = vmatpush1.msra.mxu0 0.0
  %554 = vmatprep.subr.mxu0 0.0
  %555 = vmatpush1.msra.mxu0 0.0
  %556 = vmatprep.subr.mxu0 0.0
  %557 = vmatpush1.msra.mxu0 0.0
  %558 = vmatprep.subr.mxu0 0.0
  %559 = vmatpush1.msra.mxu0 0.0
  %560 = vmatprep.subr.mxu0 0.0
  %561 = vmatpush1.msra.mxu0 0.0
  %562 = vmatprep.subr.mxu0 0.0
  %563 = vmatpush1.msra.mxu0 0.0
  %564 = vmatprep.subr.mxu0 0.0
  %565 = vmatpush1.msra.mxu0 0.0
  %566 = vmatprep.subr.mxu0 0.0
  %567 = vmatpush1.msra.mxu0 0.0
  %568 = vmatprep.subr.mxu0 0.0
  %569 = vmatpush1.msra.mxu0 0.0
  %570 = vmatprep.subr.mxu0 0.0
  %571 = vmatpush1.msra.mxu0 0.0
  %572 = vmatprep.subr.mxu0 0.0
  %573 = vmatpush1.msra.mxu0 0.0
  %574 = vmatprep.subr.mxu0 0.0
  %575 = vmatpush1.msra.mxu0 0.0
  %576 = vmatprep.subr.mxu0 0.0
  %577 = vmatpush1.msra.mxu0 0.0
  %578 = vmatprep.subr.mxu0 0.0
  %579 = vmatpush1.msra.mxu0 0.0
  %580 = vmatprep.subr.mxu0 0.0
  %581 = vmatpush1.msra.mxu0 0.0
  %582 = vmatprep.subr.mxu0 0.0
  %583 = vmatpush1.msra.mxu0 0.0
  %584 = vmatprep.subr.mxu0 0.0
  %585 = vmatpush1.msra.mxu0 0.0
  %586 = vmatprep.subr.mxu0 0.0
  %587 = vmatpush1.msra.mxu0 0.0
  %588 = vmatprep.subr.mxu0 0.0
  %589 = vmatpush1.msra.mxu0 0.0
  %590 = vmatprep.subr.mxu0 0.0
  %591 = vmatpush1.msra.mxu0 0.0
  %592 = vmatprep.subr.mxu0 0.0
  %593 = vmatpush1.msra.mxu0 0.0
  %594 = vmatprep.mubr.f32.mxu0 0.0
  %595 = vmatmul.mubr.f32.gmra.mrb[0].mxu0 %v528
  %v596 = vpop.f32.mrb[0].mxu0
  %v597 = vadd.f32 0.0, %v596
  %v598 = vpop.f32.mrb[0].mxu0
  %599 = vdwg.mxu0
  %v600 = vmul.f32 %v421, %v421
  %v602 = vsel %vm382, %v600, 0
  %604 = vmatprep.subr.mxu0 0.0
  %605 = vmatpush1.msra.mxu0 %v438
  %606 = vmatprep.subr.mxu0 0.0
  %607 = vmatpush1.msra.mxu0 %v439
  %608 = vmatprep.subr.mxu0 0.0
  %609 = vmatpush1.msra.mxu0 %v440
  %610 = vmatprep.subr.mxu0 0.0
  %611 = vmatpush1.msra.mxu0 %v441
  %612 = vmatprep.subr.mxu0 0.0
  %613 = vmatpush1.msra.mxu0 %v442
  %614 = vmatprep.subr.mxu0 0.0
  %615 = vmatpush1.msra.mxu0 %v443
  %616 = vmatprep.subr.mxu0 0.0
  %617 = vmatpush1.msra.mxu0 %v444
  %618 = vmatprep.subr.mxu0 0.0
  %619 = vmatpush1.msra.mxu0 %v445
  %620 = vmatprep.subr.mxu0 0.0
  %621 = vmatpush1.msra.mxu0 0.0
  %622 = vmatprep.subr.mxu0 0.0
  %623 = vmatpush1.msra.mxu0 0.0
  %624 = vmatprep.subr.mxu0 0.0
  %625 = vmatpush1.msra.mxu0 0.0
  %626 = vmatprep.subr.mxu0 0.0
  %627 = vmatpush1.msra.mxu0 0.0
  %628 = vmatprep.subr.mxu0 0.0
  %629 = vmatpush1.msra.mxu0 0.0
  %630 = vmatprep.subr.mxu0 0.0
  %631 = vmatpush1.msra.mxu0 0.0
  %632 = vmatprep.subr.mxu0 0.0
  %633 = vmatpush1.msra.mxu0 0.0
  %634 = vmatprep.subr.mxu0 0.0
  %635 = vmatpush1.msra.mxu0 0.0
  %636 = vmatprep.subr.mxu0 0.0
  %637 = vmatpush1.msra.mxu0 0.0
  %638 = vmatprep.subr.mxu0 0.0
  %639 = vmatpush1.msra.mxu0 0.0
  %640 = vmatprep.subr.mxu0 0.0
  %641 = vmatpush1.msra.mxu0 0.0
  %642 = vmatprep.subr.mxu0 0.0
  %643 = vmatpush1.msra.mxu0 0.0
  %644 = vmatprep.subr.mxu0 0.0
  %645 = vmatpush1.msra.mxu0 0.0
  %646 = vmatprep.subr.mxu0 0.0
  %647 = vmatpush1.msra.mxu0 0.0
  %648 = vmatprep.subr.mxu0 0.0
  %649 = vmatpush1.msra.mxu0 0.0
  %650 = vmatprep.subr.mxu0 0.0
  %651 = vmatpush1.msra.mxu0 0.0
  %652 = vmatprep.subr.mxu0 0.0
  %653 = vmatpush1.msra.mxu0 0.0
  %654 = vmatprep.subr.mxu0 0.0
  %655 = vmatpush1.msra.mxu0 0.0
  %656 = vmatprep.subr.mxu0 0.0
  %657 = vmatpush1.msra.mxu0 0.0
  %658 = vmatprep.subr.mxu0 0.0
  %659 = vmatpush1.msra.mxu0 0.0
  %660 = vmatprep.subr.mxu0 0.0
  %661 = vmatpush1.msra.mxu0 0.0
  %662 = vmatprep.subr.mxu0 0.0
  %663 = vmatpush1.msra.mxu0 0.0
  %664 = vmatprep.subr.mxu0 0.0
  %665 = vmatpush1.msra.mxu0 0.0
  %666 = vmatprep.subr.mxu0 0.0
  %667 = vmatpush1.msra.mxu0 0.0
  %668 = vmatprep.mubr.f32.mxu0 0.0
  %669 = vmatmul.mubr.f32.gmra.mrb[0].mxu0 %v602
  %v670 = vpop.f32.mrb[0].mxu0
  %v671 = vadd.f32 0.0, %v670
  %v672 = vpop.f32.mrb[0].mxu0
  %673 = vdwg.mxu0
  %v674 = vmax.f32 %v671, 1e-24
  %v675 = vrsqrt.pop %v674
  %v676 = vmul.f32 %v597, %v675
  %v677 = vmul.f32 %v676, %v525
  %v678 = vld [vmem:[%s13] sm:$0xf]
  %v679 = vld [vmem:[%s13 + $0x4] sm:$0xf]
  %v680 = vld [vmem:[%s13 + $0x8] sm:$0xf]
  %v681 = vld [vmem:[%s13 + $0xc] sm:$0xf]
  %v682 = vld [vmem:[%s14] sm:$0x1]
  %v683 = vld [vmem:[%s15] sm:$0xf]
  %v684 = vld [vmem:[%s15 + $0x4] sm:$0xf]
  %v685 = vld [vmem:[%s15 + $0x8] sm:$0xf]
  %v686 = vld [vmem:[%s15 + $0xc] sm:$0xf]
  %v687 = vld [vmem:[%s16] sm:$0x1]
  %v688 = vld [vmem:[%s4] sm:$0xff]
  %v689 = vld [vmem:[%s3] sm:$0xf]
  %v691 = vlaneseq
  %v692 = vshrl.u32 %v691, 7
  %v693 = vsub.s32 0, %v692
  %v694 = vrot.slane %v682, %v693
  %v700 = vunpack.c.l.b16 %v678
  %v701 = vunpack.c.l.b16 %v679
  %v702 = vunpack.c.l.b16 %v680
  %v703 = vunpack.c.l.b16 %v681
  %v704 = vpack.c.b16 %v701, %v700
  %v705 = vpack.c.b16 %v703, %v702
  %vm708 = vcmask 261120
  %v710 = vsel %vm708, %v689, 0
  %712 = vmatprep.subr.bf16.mxu0 0
  %713 = vmatpush1.bf16.msra.mxu0 %v704
  %714 = vmatprep.subr.bf16.mxu0 0
  %715 = vmatpush1.bf16.msra.mxu0 %v705
  %716 = vmatprep.subr.bf16.mxu0 0
  %717 = vmatpush1.bf16.msra.mxu0 0
  %718 = vmatprep.subr.bf16.mxu0 0
  %719 = vmatpush1.bf16.msra.mxu0 0
  %720 = vmatprep.subr.bf16.mxu0 0
  %721 = vmatpush1.bf16.msra.mxu0 0
  %722 = vmatprep.subr.bf16.mxu0 0
  %723 = vmatpush1.bf16.msra.mxu0 0
  %724 = vmatprep.subr.bf16.mxu0 0
  %725 = vmatpush1.bf16.msra.mxu0 0
  %726 = vmatprep.subr.bf16.mxu0 0
  %727 = vmatpush1.bf16.msra.mxu0 0
  %728 = vmatprep.subr.bf16.mxu0 0
  %729 = vmatpush1.bf16.msra.mxu0 0
  %730 = vmatprep.subr.bf16.mxu0 0
  %731 = vmatpush1.bf16.msra.mxu0 0
  %732 = vmatprep.subr.bf16.mxu0 0
  %733 = vmatpush1.bf16.msra.mxu0 0
  %734 = vmatprep.subr.bf16.mxu0 0
  %735 = vmatpush1.bf16.msra.mxu0 0
  %736 = vmatprep.subr.bf16.mxu0 0
  %737 = vmatpush1.bf16.msra.mxu0 0
  %738 = vmatprep.subr.bf16.mxu0 0
  %739 = vmatpush1.bf16.msra.mxu0 0
  %740 = vmatprep.subr.bf16.mxu0 0
  %741 = vmatpush1.bf16.msra.mxu0 0
  %742 = vmatprep.subr.bf16.mxu0 0
  %743 = vmatpush1.bf16.msra.mxu0 0
  %744 = vmatprep.mubr.bf16.mxu0 0
  %745 = vmatmul.mubr.bf16.gmra.mrb[0].mxu0 %v710
  %v746 = vpop.f32.mrb[0].mxu0
  %v747 = vadd.f32 %v694, %v746
  %v748 = vpop.f32.mrb[0].mxu0
  %v749 = vpop.f32.mrb[0].mxu0
  %v750 = vpop.f32.mrb[0].mxu0
  %751 = vdwg.mxu0
  %v752 = vmax.f32 %v747, 0.0
  %v753 = vpack.c.bf16 %v752, %v752
  %v755 = vlaneseq
  %v756 = vshrl.u32 %v755, 7
  %v757 = vsub.s32 0, %v756
  %v758 = vrot.slane %v687, %v757
  %v764 = vunpack.c.l.b16 %v683
  %v765 = vunpack.c.l.b16 %v684
  %v766 = vunpack.c.l.b16 %v685
  %v767 = vunpack.c.l.b16 %v686
  %v768 = vpack.c.b16 %v765, %v764
  %v769 = vpack.c.b16 %v767, %v766
  %v773 = vsel %vm708, %v753, 0
  %775 = vmatprep.subr.bf16.mxu0 0
  %776 = vmatpush1.bf16.msra.mxu0 %v768
  %777 = vmatprep.subr.bf16.mxu0 0
  %778 = vmatpush1.bf16.msra.mxu0 %v769
  %779 = vmatprep.subr.bf16.mxu0 0
  %780 = vmatpush1.bf16.msra.mxu0 0
  %781 = vmatprep.subr.bf16.mxu0 0
  %782 = vmatpush1.bf16.msra.mxu0 0
  %783 = vmatprep.subr.bf16.mxu0 0
  %784 = vmatpush1.bf16.msra.mxu0 0
  %785 = vmatprep.subr.bf16.mxu0 0
  %786 = vmatpush1.bf16.msra.mxu0 0
  %787 = vmatprep.subr.bf16.mxu0 0
  %788 = vmatpush1.bf16.msra.mxu0 0
  %789 = vmatprep.subr.bf16.mxu0 0
  %790 = vmatpush1.bf16.msra.mxu0 0
  %791 = vmatprep.subr.bf16.mxu0 0
  %792 = vmatpush1.bf16.msra.mxu0 0
  %793 = vmatprep.subr.bf16.mxu0 0
  %794 = vmatpush1.bf16.msra.mxu0 0
  %795 = vmatprep.subr.bf16.mxu0 0
  %796 = vmatpush1.bf16.msra.mxu0 0
  %797 = vmatprep.subr.bf16.mxu0 0
  %798 = vmatpush1.bf16.msra.mxu0 0
  %799 = vmatprep.subr.bf16.mxu0 0
  %800 = vmatpush1.bf16.msra.mxu0 0
  %801 = vmatprep.subr.bf16.mxu0 0
  %802 = vmatpush1.bf16.msra.mxu0 0
  %803 = vmatprep.subr.bf16.mxu0 0
  %804 = vmatpush1.bf16.msra.mxu0 0
  %805 = vmatprep.subr.bf16.mxu0 0
  %806 = vmatpush1.bf16.msra.mxu0 0
  %807 = vmatprep.mubr.bf16.mxu0 0
  %808 = vmatmul.mubr.bf16.gmra.mrb[0].mxu0 %v773
  %v809 = vpop.f32.mrb[0].mxu0
  %v810 = vadd.f32 %v758, %v809
  %v811 = vpop.f32.mrb[0].mxu0
  %v812 = vpop.f32.mrb[0].mxu0
  %v813 = vpop.f32.mrb[0].mxu0
  %814 = vdwg.mxu0
  %816 = vrot.lane.b32.xlu0 %v244, 64
  %v817 = vpop.permute.xlu0 %816
  %v819 = vmul.f32 %v810, %v817
  %v821 = vsel %vm708, %v819, 0
  %823 = vmatprep.subr.mxu0 0.0
  %824 = vmatpush1.msra.mxu0 %v446
  %825 = vmatprep.subr.mxu0 0.0
  %826 = vmatpush1.msra.mxu0 %v447
  %827 = vmatprep.subr.mxu0 0.0
  %828 = vmatpush1.msra.mxu0 %v448
  %829 = vmatprep.subr.mxu0 0.0
  %830 = vmatpush1.msra.mxu0 %v449
  %831 = vmatprep.subr.mxu0 0.0
  %832 = vmatpush1.msra.mxu0 0.0
  %833 = vmatprep.subr.mxu0 0.0
  %834 = vmatpush1.msra.mxu0 0.0
  %835 = vmatprep.subr.mxu0 0.0
  %836 = vmatpush1.msra.mxu0 0.0
  %837 = vmatprep.subr.mxu0 0.0
  %838 = vmatpush1.msra.mxu0 0.0
  %839 = vmatprep.subr.mxu0 0.0
  %840 = vmatpush1.msra.mxu0 0.0
  %841 = vmatprep.subr.mxu0 0.0
  %842 = vmatpush1.msra.mxu0 0.0
  %843 = vmatprep.subr.mxu0 0.0
  %844 = vmatpush1.msra.mxu0 0.0
  %845 = vmatprep.subr.mxu0 0.0
  %846 = vmatpush1.msra.mxu0 0.0
  %847 = vmatprep.subr.mxu0 0.0
  %848 = vmatpush1.msra.mxu0 0.0
  %849 = vmatprep.subr.mxu0 0.0
  %850 = vmatpush1.msra.mxu0 0.0
  %851 = vmatprep.subr.mxu0 0.0
  %852 = vmatpush1.msra.mxu0 0.0
  %853 = vmatprep.subr.mxu0 0.0
  %854 = vmatpush1.msra.mxu0 0.0
  %855 = vmatprep.subr.mxu0 0.0
  %856 = vmatpush1.msra.mxu0 0.0
  %857 = vmatprep.subr.mxu0 0.0
  %858 = vmatpush1.msra.mxu0 0.0
  %859 = vmatprep.subr.mxu0 0.0
  %860 = vmatpush1.msra.mxu0 0.0
  %861 = vmatprep.subr.mxu0 0.0
  %862 = vmatpush1.msra.mxu0 0.0
  %863 = vmatprep.subr.mxu0 0.0
  %864 = vmatpush1.msra.mxu0 0.0
  %865 = vmatprep.subr.mxu0 0.0
  %866 = vmatpush1.msra.mxu0 0.0
  %867 = vmatprep.subr.mxu0 0.0
  %868 = vmatpush1.msra.mxu0 0.0
  %869 = vmatprep.subr.mxu0 0.0
  %870 = vmatpush1.msra.mxu0 0.0
  %871 = vmatprep.subr.mxu0 0.0
  %872 = vmatpush1.msra.mxu0 0.0
  %873 = vmatprep.subr.mxu0 0.0
  %874 = vmatpush1.msra.mxu0 0.0
  %875 = vmatprep.subr.mxu0 0.0
  %876 = vmatpush1.msra.mxu0 0.0
  %877 = vmatprep.subr.mxu0 0.0
  %878 = vmatpush1.msra.mxu0 0.0
  %879 = vmatprep.subr.mxu0 0.0
  %880 = vmatpush1.msra.mxu0 0.0
  %881 = vmatprep.subr.mxu0 0.0
  %882 = vmatpush1.msra.mxu0 0.0
  %883 = vmatprep.subr.mxu0 0.0
  %884 = vmatpush1.msra.mxu0 0.0
  %885 = vmatprep.subr.mxu0 0.0
  %886 = vmatpush1.msra.mxu0 0.0
  %887 = vmatprep.mubr.f32.mxu0 0.0
  %888 = vmatmul.mubr.f32.gmra.mrb[0].mxu0 %v821
  %v889 = vpop.f32.mrb[0].mxu0
  %v890 = vadd.f32 0.0, %v889
  %v891 = vpop.f32.mrb[0].mxu0
  %892 = vdwg.mxu0
  %v893 = vmul.f32 %v810, %v810
  %v895 = vsel %vm708, %v893, 0
  %897 = vmatprep.subr.mxu0 0.0
  %898 = vmatpush1.msra.mxu0 %v446
  %899 = vmatprep.subr.mxu0 0.0
  %900 = vmatpush1.msra.mxu0 %v447
  %901 = vmatprep.subr.mxu0 0.0
  %902 = vmatpush1.msra.mxu0 %v448
  %903 = vmatprep.subr.mxu0 0.0
  %904 = vmatpush1.msra.mxu0 %v449
  %905 = vmatprep.subr.mxu0 0.0
  %906 = vmatpush1.msra.mxu0 0.0
  %907 = vmatprep.subr.mxu0 0.0
  %908 = vmatpush1.msra.mxu0 0.0
  %909 = vmatprep.subr.mxu0 0.0
  %910 = vmatpush1.msra.mxu0 0.0
  %911 = vmatprep.subr.mxu0 0.0
  %912 = vmatpush1.msra.mxu0 0.0
  %913 = vmatprep.subr.mxu0 0.0
  %914 = vmatpush1.msra.mxu0 0.0
  %915 = vmatprep.subr.mxu0 0.0
  %916 = vmatpush1.msra.mxu0 0.0
  %917 = vmatprep.subr.mxu0 0.0
  %918 = vmatpush1.msra.mxu0 0.0
  %919 = vmatprep.subr.mxu0 0.0
  %920 = vmatpush1.msra.mxu0 0.0
  %921 = vmatprep.subr.mxu0 0.0
  %922 = vmatpush1.msra.mxu0 0.0
  %923 = vmatprep.subr.mxu0 0.0
  %924 = vmatpush1.msra.mxu0 0.0
  %925 = vmatprep.subr.mxu0 0.0
  %926 = vmatpush1.msra.mxu0 0.0
  %927 = vmatprep.subr.mxu0 0.0
  %928 = vmatpush1.msra.mxu0 0.0
  %929 = vmatprep.subr.mxu0 0.0
  %930 = vmatpush1.msra.mxu0 0.0
  %931 = vmatprep.subr.mxu0 0.0
  %932 = vmatpush1.msra.mxu0 0.0
  %933 = vmatprep.subr.mxu0 0.0
  %934 = vmatpush1.msra.mxu0 0.0
  %935 = vmatprep.subr.mxu0 0.0
  %936 = vmatpush1.msra.mxu0 0.0
  %937 = vmatprep.subr.mxu0 0.0
  %938 = vmatpush1.msra.mxu0 0.0
  %939 = vmatprep.subr.mxu0 0.0
  %940 = vmatpush1.msra.mxu0 0.0
  %941 = vmatprep.subr.mxu0 0.0
  %942 = vmatpush1.msra.mxu0 0.0
  %943 = vmatprep.subr.mxu0 0.0
  %944 = vmatpush1.msra.mxu0 0.0
  %945 = vmatprep.subr.mxu0 0.0
  %946 = vmatpush1.msra.mxu0 0.0
  %947 = vmatprep.subr.mxu0 0.0
  %948 = vmatpush1.msra.mxu0 0.0
  %949 = vmatprep.subr.mxu0 0.0
  %950 = vmatpush1.msra.mxu0 0.0
  %951 = vmatprep.subr.mxu0 0.0
  %952 = vmatpush1.msra.mxu0 0.0
  %953 = vmatprep.subr.mxu0 0.0
  %954 = vmatpush1.msra.mxu0 0.0
  %955 = vmatprep.subr.mxu0 0.0
  %956 = vmatpush1.msra.mxu0 0.0
  %957 = vmatprep.subr.mxu0 0.0
  %958 = vmatpush1.msra.mxu0 0.0
  %959 = vmatprep.subr.mxu0 0.0
  %960 = vmatpush1.msra.mxu0 0.0
  %961 = vmatprep.mubr.f32.mxu0 0.0
  %962 = vmatmul.mubr.f32.gmra.mrb[0].mxu0 %v895
  %v963 = vpop.f32.mrb[0].mxu0
  %v964 = vadd.f32 0.0, %v963
  %v965 = vpop.f32.mrb[0].mxu0
  %966 = vdwg.mxu0
  %v967 = vmax.f32 %v964, 1e-24
  %v968 = vrsqrt.pop %v967
  %v969 = vmul.f32 %v890, %v968
  %971 = vrot.lane.b32.xlu0 %v525, 126
  %v972 = vpop.permute.xlu0 %971
  %v974 = vmul.f32 %v969, %v972
  %v975 = vmul.f32 %v688, %v974
  %v977 = vunpack.c.l.b16 %v689
  %v978 = vpack.c.b16 %v977, %v977
  %979 = vrot.lane.b32.xlu0 %v978, 96
  %v980 = vpop.permute.xlu0 %979
  %v982 = vsel %vm708, %v980, 0
  %984 = vmatprep.subr.bf16.mxu0 0
  %985 = vmatpush1.bf16.msra.mxu0 %v704
  %986 = vmatprep.subr.bf16.mxu0 0
  %987 = vmatpush1.bf16.msra.mxu0 %v705
  %988 = vmatprep.subr.bf16.mxu0 0
  %989 = vmatpush1.bf16.msra.mxu0 0
  %990 = vmatprep.subr.bf16.mxu0 0
  %991 = vmatpush1.bf16.msra.mxu0 0
  %992 = vmatprep.subr.bf16.mxu0 0
  %993 = vmatpush1.bf16.msra.mxu0 0
  %994 = vmatprep.subr.bf16.mxu0 0
  %995 = vmatpush1.bf16.msra.mxu0 0
  %996 = vmatprep.subr.bf16.mxu0 0
  %997 = vmatpush1.bf16.msra.mxu0 0
  %998 = vmatprep.subr.bf16.mxu0 0
  %999 = vmatpush1.bf16.msra.mxu0 0
  %1000 = vmatprep.subr.bf16.mxu0 0
  %1001 = vmatpush1.bf16.msra.mxu0 0
  %1002 = vmatprep.subr.bf16.mxu0 0
  %1003 = vmatpush1.bf16.msra.mxu0 0
  %1004 = vmatprep.subr.bf16.mxu0 0
  %1005 = vmatpush1.bf16.msra.mxu0 0
  %1006 = vmatprep.subr.bf16.mxu0 0
  %1007 = vmatpush1.bf16.msra.mxu0 0
  %1008 = vmatprep.subr.bf16.mxu0 0
  %1009 = vmatpush1.bf16.msra.mxu0 0
  %1010 = vmatprep.subr.bf16.mxu0 0
  %1011 = vmatpush1.bf16.msra.mxu0 0
  %1012 = vmatprep.subr.bf16.mxu0 0
  %1013 = vmatpush1.bf16.msra.mxu0 0
  %1014 = vmatprep.subr.bf16.mxu0 0
  %1015 = vmatpush1.bf16.msra.mxu0 0
  %1016 = vmatprep.mubr.bf16.mxu0 0
  %1017 = vmatmul.mubr.bf16.gmra.mrb[0].mxu0 %v982
  %v1018 = vpop.f32.mrb[0].mxu0
  %v1019 = vadd.f32 %v694, %v1018
  %v1020 = vpop.f32.mrb[0].mxu0
  %v1021 = vpop.f32.mrb[0].mxu0
  %v1022 = vpop.f32.mrb[0].mxu0
  %1023 = vdwg.mxu0
  %v1024 = vmax.f32 %v1019, 0.0
  %v1025 = vpack.c.bf16 %v1024, %v1024
  %v1027 = vsel %vm708, %v1025, 0
  %1029 = vmatprep.subr.bf16.mxu0 0
  %1030 = vmatpush1.bf16.msra.mxu0 %v768
  %1031 = vmatprep.subr.bf16.mxu0 0
  %1032 = vmatpush1.bf16.msra.mxu0 %v769
  %1033 = vmatprep.subr.bf16.mxu0 0
  %1034 = vmatpush1.bf16.msra.mxu0 0
  %1035 = vmatprep.subr.bf16.mxu0 0
  %1036 = vmatpush1.bf16.msra.mxu0 0
  %1037 = vmatprep.subr.bf16.mxu0 0
  %1038 = vmatpush1.bf16.msra.mxu0 0
  %1039 = vmatprep.subr.bf16.mxu0 0
  %1040 = vmatpush1.bf16.msra.mxu0 0
  %1041 = vmatprep.subr.bf16.mxu0 0
  %1042 = vmatpush1.bf16.msra.mxu0 0
  %1043 = vmatprep.subr.bf16.mxu0 0
  %1044 = vmatpush1.bf16.msra.mxu0 0
  %1045 = vmatprep.subr.bf16.mxu0 0
  %1046 = vmatpush1.bf16.msra.mxu0 0
  %1047 = vmatprep.subr.bf16.mxu0 0
  %1048 = vmatpush1.bf16.msra.mxu0 0
  %1049 = vmatprep.subr.bf16.mxu0 0
  %1050 = vmatpush1.bf16.msra.mxu0 0
  %1051 = vmatprep.subr.bf16.mxu0 0
  %1052 = vmatpush1.bf16.msra.mxu0 0
  %1053 = vmatprep.subr.bf16.mxu0 0
  %1054 = vmatpush1.bf16.msra.mxu0 0
  %1055 = vmatprep.subr.bf16.mxu0 0
  %1056 = vmatpush1.bf16.msra.mxu0 0
  %1057 = vmatprep.subr.bf16.mxu0 0
  %1058 = vmatpush1.bf16.msra.mxu0 0
  %1059 = vmatprep.subr.bf16.mxu0 0
  %1060 = vmatpush1.bf16.msra.mxu0 0
  %1061 = vmatprep.mubr.bf16.mxu0 0
  %1062 = vmatmul.mubr.bf16.gmra.mrb[0].mxu0 %v1027
  %v1063 = vpop.f32.mrb[0].mxu0
  %v1064 = vadd.f32 %v758, %v1063
  %v1065 = vpop.f32.mrb[0].mxu0
  %v1066 = vpop.f32.mrb[0].mxu0
  %v1067 = vpop.f32.mrb[0].mxu0
  %1068 = vdwg.mxu0
  %v1069 = vmul.f32 %v1064, %v817
  %v1071 = vsel %vm708, %v1069, 0
  %1073 = vmatprep.subr.mxu0 0.0
  %1074 = vmatpush1.msra.mxu0 %v446
  %1075 = vmatprep.subr.mxu0 0.0
  %1076 = vmatpush1.msra.mxu0 %v447
  %1077 = vmatprep.subr.mxu0 0.0
  %1078 = vmatpush1.msra.mxu0 %v448
  %1079 = vmatprep.subr.mxu0 0.0
  %1080 = vmatpush1.msra.mxu0 %v449
  %1081 = vmatprep.subr.mxu0 0.0
  %1082 = vmatpush1.msra.mxu0 0.0
  %1083 = vmatprep.subr.mxu0 0.0
  %1084 = vmatpush1.msra.mxu0 0.0
  %1085 = vmatprep.subr.mxu0 0.0
  %1086 = vmatpush1.msra.mxu0 0.0
  %1087 = vmatprep.subr.mxu0 0.0
  %1088 = vmatpush1.msra.mxu0 0.0
  %1089 = vmatprep.subr.mxu0 0.0
  %1090 = vmatpush1.msra.mxu0 0.0
  %1091 = vmatprep.subr.mxu0 0.0
  %1092 = vmatpush1.msra.mxu0 0.0
  %1093 = vmatprep.subr.mxu0 0.0
  %1094 = vmatpush1.msra.mxu0 0.0
  %1095 = vmatprep.subr.mxu0 0.0
  %1096 = vmatpush1.msra.mxu0 0.0
  %1097 = vmatprep.subr.mxu0 0.0
  %1098 = vmatpush1.msra.mxu0 0.0
  %1099 = vmatprep.subr.mxu0 0.0
  %1100 = vmatpush1.msra.mxu0 0.0
  %1101 = vmatprep.subr.mxu0 0.0
  %1102 = vmatpush1.msra.mxu0 0.0
  %1103 = vmatprep.subr.mxu0 0.0
  %1104 = vmatpush1.msra.mxu0 0.0
  %1105 = vmatprep.subr.mxu0 0.0
  %1106 = vmatpush1.msra.mxu0 0.0
  %1107 = vmatprep.subr.mxu0 0.0
  %1108 = vmatpush1.msra.mxu0 0.0
  %1109 = vmatprep.subr.mxu0 0.0
  %1110 = vmatpush1.msra.mxu0 0.0
  %1111 = vmatprep.subr.mxu0 0.0
  %1112 = vmatpush1.msra.mxu0 0.0
  %1113 = vmatprep.subr.mxu0 0.0
  %1114 = vmatpush1.msra.mxu0 0.0
  %1115 = vmatprep.subr.mxu0 0.0
  %1116 = vmatpush1.msra.mxu0 0.0
  %1117 = vmatprep.subr.mxu0 0.0
  %1118 = vmatpush1.msra.mxu0 0.0
  %1119 = vmatprep.subr.mxu0 0.0
  %1120 = vmatpush1.msra.mxu0 0.0
  %1121 = vmatprep.subr.mxu0 0.0
  %1122 = vmatpush1.msra.mxu0 0.0
  %1123 = vmatprep.subr.mxu0 0.0
  %1124 = vmatpush1.msra.mxu0 0.0
  %1125 = vmatprep.subr.mxu0 0.0
  %1126 = vmatpush1.msra.mxu0 0.0
  %1127 = vmatprep.subr.mxu0 0.0
  %1128 = vmatpush1.msra.mxu0 0.0
  %1129 = vmatprep.subr.mxu0 0.0
  %1130 = vmatpush1.msra.mxu0 0.0
  %1131 = vmatprep.subr.mxu0 0.0
  %1132 = vmatpush1.msra.mxu0 0.0
  %1133 = vmatprep.subr.mxu0 0.0
  %1134 = vmatpush1.msra.mxu0 0.0
  %1135 = vmatprep.subr.mxu0 0.0
  %1136 = vmatpush1.msra.mxu0 0.0
  %1137 = vmatprep.mubr.f32.mxu0 0.0
  %1138 = vmatmul.mubr.f32.gmra.mrb[0].mxu0 %v1071
  %v1139 = vpop.f32.mrb[0].mxu0
  %v1140 = vadd.f32 0.0, %v1139
  %v1141 = vpop.f32.mrb[0].mxu0
  %1142 = vdwg.mxu0
  %v1143 = vmul.f32 %v1064, %v1064
  %v1145 = vsel %vm708, %v1143, 0
  %1147 = vmatprep.subr.mxu0 0.0
  %1148 = vmatpush1.msra.mxu0 %v446
  %1149 = vmatprep.subr.mxu0 0.0
  %1150 = vmatpush1.msra.mxu0 %v447
  %1151 = vmatprep.subr.mxu0 0.0
  %1152 = vmatpush1.msra.mxu0 %v448
  %1153 = vmatprep.subr.mxu0 0.0
  %1154 = vmatpush1.msra.mxu0 %v449
  %1155 = vmatprep.subr.mxu0 0.0
  %1156 = vmatpush1.msra.mxu0 0.0
  %1157 = vmatprep.subr.mxu0 0.0
  %1158 = vmatpush1.msra.mxu0 0.0
  %1159 = vmatprep.subr.mxu0 0.0
  %1160 = vmatpush1.msra.mxu0 0.0
  %1161 = vmatprep.subr.mxu0 0.0
  %1162 = vmatpush1.msra.mxu0 0.0
  %1163 = vmatprep.subr.mxu0 0.0
  %1164 = vmatpush1.msra.mxu0 0.0
  %1165 = vmatprep.subr.mxu0 0.0
  %1166 = vmatpush1.msra.mxu0 0.0
  %1167 = vmatprep.subr.mxu0 0.0
  %1168 = vmatpush1.msra.mxu0 0.0
  %1169 = vmatprep.subr.mxu0 0.0
  %1170 = vmatpush1.msra.mxu0 0.0
  %1171 = vmatprep.subr.mxu0 0.0
  %1172 = vmatpush1.msra.mxu0 0.0
  %1173 = vmatprep.subr.mxu0 0.0
  %1174 = vmatpush1.msra.mxu0 0.0
  %1175 = vmatprep.subr.mxu0 0.0
  %1176 = vmatpush1.msra.mxu0 0.0
  %1177 = vmatprep.subr.mxu0 0.0
  %1178 = vmatpush1.msra.mxu0 0.0
  %1179 = vmatprep.subr.mxu0 0.0
  %1180 = vmatpush1.msra.mxu0 0.0
  %1181 = vmatprep.subr.mxu0 0.0
  %1182 = vmatpush1.msra.mxu0 0.0
  %1183 = vmatprep.subr.mxu0 0.0
  %1184 = vmatpush1.msra.mxu0 0.0
  %1185 = vmatprep.subr.mxu0 0.0
  %1186 = vmatpush1.msra.mxu0 0.0
  %1187 = vmatprep.subr.mxu0 0.0
  %1188 = vmatpush1.msra.mxu0 0.0
  %1189 = vmatprep.subr.mxu0 0.0
  %1190 = vmatpush1.msra.mxu0 0.0
  %1191 = vmatprep.subr.mxu0 0.0
  %1192 = vmatpush1.msra.mxu0 0.0
  %1193 = vmatprep.subr.mxu0 0.0
  %1194 = vmatpush1.msra.mxu0 0.0
  %1195 = vmatprep.subr.mxu0 0.0
  %1196 = vmatpush1.msra.mxu0 0.0
  %1197 = vmatprep.subr.mxu0 0.0
  %1198 = vmatpush1.msra.mxu0 0.0
  %1199 = vmatprep.subr.mxu0 0.0
  %1200 = vmatpush1.msra.mxu0 0.0
  %1201 = vmatprep.subr.mxu0 0.0
  %1202 = vmatpush1.msra.mxu0 0.0
  %1203 = vmatprep.subr.mxu0 0.0
  %1204 = vmatpush1.msra.mxu0 0.0
  %1205 = vmatprep.subr.mxu0 0.0
  %1206 = vmatpush1.msra.mxu0 0.0
  %1207 = vmatprep.subr.mxu0 0.0
  %1208 = vmatpush1.msra.mxu0 0.0
  %1209 = vmatprep.subr.mxu0 0.0
  %1210 = vmatpush1.msra.mxu0 0.0
  %1211 = vmatprep.mubr.f32.mxu0 0.0
  %1212 = vmatmul.mubr.f32.gmra.mrb[0].mxu0 %v1145
  %v1213 = vpop.f32.mrb[0].mxu0
  %v1214 = vadd.f32 0.0, %v1213
  %v1215 = vpop.f32.mrb[0].mxu0
  %1216 = vdwg.mxu0
  %v1217 = vmax.f32 %v1214, 1e-24
  %v1218 = vrsqrt.pop %v1217
  %v1219 = vmul.f32 %v1140, %v1218
  %v1220 = vmul.f32 %v1219, %v972
  %1222 = vrot.lane.b32.xlu0 %v1220, 1
  %v1223 = vpop.permute.xlu0 %1222
  %v1225 = vmul.f32 %v688, %v1223
  %1227 = vrot.lane.b32.xlu0 %v975, 1
  %v1228 = vpop.permute.xlu0 %1227
  %vm1230 = vcmp.gt.f32.partialorder %v1225, %v1228
  %v1231 = vsel %vm1230, %v1225, %v1228
  %v1232 = vsel %vm1230, 1.0, 0.0
  %1233 = vrot.lane.b32.xlu0 %v978, 64
  %v1234 = vpop.permute.xlu0 %1233
  %v1236 = vsel %vm708, %v1234, 0
  %1238 = vmatprep.subr.bf16.mxu0 0
  %1239 = vmatpush1.bf16.msra.mxu0 %v704
  %1240 = vmatprep.subr.bf16.mxu0 0
  %1241 = vmatpush1.bf16.msra.mxu0 %v705
  %1242 = vmatprep.subr.bf16.mxu0 0
  %1243 = vmatpush1.bf16.msra.mxu0 0
  %1244 = vmatprep.subr.bf16.mxu0 0
  %1245 = vmatpush1.bf16.msra.mxu0 0
  %1246 = vmatprep.subr.bf16.mxu0 0
  %1247 = vmatpush1.bf16.msra.mxu0 0
  %1248 = vmatprep.subr.bf16.mxu0 0
  %1249 = vmatpush1.bf16.msra.mxu0 0
  %1250 = vmatprep.subr.bf16.mxu0 0
  %1251 = vmatpush1.bf16.msra.mxu0 0
  %1252 = vmatprep.subr.bf16.mxu0 0
  %1253 = vmatpush1.bf16.msra.mxu0 0
  %1254 = vmatprep.subr.bf16.mxu0 0
  %1255 = vmatpush1.bf16.msra.mxu0 0
  %1256 = vmatprep.subr.bf16.mxu0 0
  %1257 = vmatpush1.bf16.msra.mxu0 0
  %1258 = vmatprep.subr.bf16.mxu0 0
  %1259 = vmatpush1.bf16.msra.mxu0 0
  %1260 = vmatprep.subr.bf16.mxu0 0
  %1261 = vmatpush1.bf16.msra.mxu0 0
  %1262 = vmatprep.subr.bf16.mxu0 0
  %1263 = vmatpush1.bf16.msra.mxu0 0
  %1264 = vmatprep.subr.bf16.mxu0 0
  %1265 = vmatpush1.bf16.msra.mxu0 0
  %1266 = vmatprep.subr.bf16.mxu0 0
  %1267 = vmatpush1.bf16.msra.mxu0 0
  %1268 = vmatprep.subr.bf16.mxu0 0
  %1269 = vmatpush1.bf16.msra.mxu0 0
  %1270 = vmatprep.mubr.bf16.mxu0 0
  %1271 = vmatmul.mubr.bf16.gmra.mrb[0].mxu0 %v1236
  %v1272 = vpop.f32.mrb[0].mxu0
  %v1273 = vadd.f32 %v694, %v1272
  %v1274 = vpop.f32.mrb[0].mxu0
  %v1275 = vpop.f32.mrb[0].mxu0
  %v1276 = vpop.f32.mrb[0].mxu0
  %1277 = vdwg.mxu0
  %v1278 = vmax.f32 %v1273, 0.0
  %v1279 = vpack.c.bf16 %v1278, %v1278
  %v1281 = vsel %vm708, %v1279, 0
  %1283 = vmatprep.subr.bf16.mxu0 0
  %1284 = vmatpush1.bf16.msra.mxu0 %v768
  %1285 = vmatprep.subr.bf16.mxu0 0
  %1286 = vmatpush1.bf16.msra.mxu0 %v769
  %1287 = vmatprep.subr.bf16.mxu0 0
  %1288 = vmatpush1.bf16.msra.mxu0 0
  %1289 = vmatprep.subr.bf16.mxu0 0
  %1290 = vmatpush1.bf16.msra.mxu0 0
  %1291 = vmatprep.subr.bf16.mxu0 0
  %1292 = vmatpush1.bf16.msra.mxu0 0
  %1293 = vmatprep.subr.bf16.mxu0 0
  %1294 = vmatpush1.bf16.msra.mxu0 0
  %1295 = vmatprep.subr.bf16.mxu0 0
  %1296 = vmatpush1.bf16.msra.mxu0 0
  %1297 = vmatprep.subr.bf16.mxu0 0
  %1298 = vmatpush1.bf16.msra.mxu0 0
  %1299 = vmatprep.subr.bf16.mxu0 0
  %1300 = vmatpush1.bf16.msra.mxu0 0
  %1301 = vmatprep.subr.bf16.mxu0 0
  %1302 = vmatpush1.bf16.msra.mxu0 0
  %1303 = vmatprep.subr.bf16.mxu0 0
  %1304 = vmatpush1.bf16.msra.mxu0 0
  %1305 = vmatprep.subr.bf16.mxu0 0
  %1306 = vmatpush1.bf16.msra.mxu0 0
  %1307 = vmatprep.subr.bf16.mxu0 0
  %1308 = vmatpush1.bf16.msra.mxu0 0
  %1309 = vmatprep.subr.bf16.mxu0 0
  %1310 = vmatpush1.bf16.msra.mxu0 0
  %1311 = vmatprep.subr.bf16.mxu0 0
  %1312 = vmatpush1.bf16.msra.mxu0 0
  %1313 = vmatprep.subr.bf16.mxu0 0
  %1314 = vmatpush1.bf16.msra.mxu0 0
  %1315 = vmatprep.mubr.bf16.mxu0 0
  %1316 = vmatmul.mubr.bf16.gmra.mrb[0].mxu0 %v1281
  %v1317 = vpop.f32.mrb[0].mxu0
  %v1318 = vadd.f32 %v758, %v1317
  %v1319 = vpop.f32.mrb[0].mxu0
  %v1320 = vpop.f32.mrb[0].mxu0
  %v1321 = vpop.f32.mrb[0].mxu0
  %1322 = vdwg.mxu0
  %v1323 = vmul.f32 %v1318, %v817
  %v1325 = vsel %vm708, %v1323, 0
  %1327 = vmatprep.subr.mxu0 0.0
  %1328 = vmatpush1.msra.mxu0 %v446
  %1329 = vmatprep.subr.mxu0 0.0
  %1330 = vmatpush1.msra.mxu0 %v447
  %1331 = vmatprep.subr.mxu0 0.0
  %1332 = vmatpush1.msra.mxu0 %v448
  %1333 = vmatprep.subr.mxu0 0.0
  %1334 = vmatpush1.msra.mxu0 %v449
  %1335 = vmatprep.subr.mxu0 0.0
  %1336 = vmatpush1.msra.mxu0 0.0
  %1337 = vmatprep.subr.mxu0 0.0
  %1338 = vmatpush1.msra.mxu0 0.0
  %1339 = vmatprep.subr.mxu0 0.0
  %1340 = vmatpush1.msra.mxu0 0.0
  %1341 = vmatprep.subr.mxu0 0.0
  %1342 = vmatpush1.msra.mxu0 0.0
  %1343 = vmatprep.subr.mxu0 0.0
  %1344 = vmatpush1.msra.mxu0 0.0
  %1345 = vmatprep.subr.mxu0 0.0
  %1346 = vmatpush1.msra.mxu0 0.0
  %1347 = vmatprep.subr.mxu0 0.0
  %1348 = vmatpush1.msra.mxu0 0.0
  %1349 = vmatprep.subr.mxu0 0.0
  %1350 = vmatpush1.msra.mxu0 0.0
  %1351 = vmatprep.subr.mxu0 0.0
  %1352 = vmatpush1.msra.mxu0 0.0
  %1353 = vmatprep.subr.mxu0 0.0
  %1354 = vmatpush1.msra.mxu0 0.0
  %1355 = vmatprep.subr.mxu0 0.0
  %1356 = vmatpush1.msra.mxu0 0.0
  %1357 = vmatprep.subr.mxu0 0.0
  %1358 = vmatpush1.msra.mxu0 0.0
  %1359 = vmatprep.subr.mxu0 0.0
  %1360 = vmatpush1.msra.mxu0 0.0
  %1361 = vmatprep.subr.mxu0 0.0
  %1362 = vmatpush1.msra.mxu0 0.0
  %1363 = vmatprep.subr.mxu0 0.0
  %1364 = vmatpush1.msra.mxu0 0.0
  %1365 = vmatprep.subr.mxu0 0.0
  %1366 = vmatpush1.msra.mxu0 0.0
  %1367 = vmatprep.subr.mxu0 0.0
  %1368 = vmatpush1.msra.mxu0 0.0
  %1369 = vmatprep.subr.mxu0 0.0
  %1370 = vmatpush1.msra.mxu0 0.0
  %1371 = vmatprep.subr.mxu0 0.0
  %1372 = vmatpush1.msra.mxu0 0.0
  %1373 = vmatprep.subr.mxu0 0.0
  %1374 = vmatpush1.msra.mxu0 0.0
  %1375 = vmatprep.subr.mxu0 0.0
  %1376 = vmatpush1.msra.mxu0 0.0
  %1377 = vmatprep.subr.mxu0 0.0
  %1378 = vmatpush1.msra.mxu0 0.0
  %1379 = vmatprep.subr.mxu0 0.0
  %1380 = vmatpush1.msra.mxu0 0.0
  %1381 = vmatprep.subr.mxu0 0.0
  %1382 = vmatpush1.msra.mxu0 0.0
  %1383 = vmatprep.subr.mxu0 0.0
  %1384 = vmatpush1.msra.mxu0 0.0
  %1385 = vmatprep.subr.mxu0 0.0
  %1386 = vmatpush1.msra.mxu0 0.0
  %1387 = vmatprep.subr.mxu0 0.0
  %1388 = vmatpush1.msra.mxu0 0.0
  %1389 = vmatprep.subr.mxu0 0.0
  %1390 = vmatpush1.msra.mxu0 0.0
  %1391 = vmatprep.mubr.f32.mxu0 0.0
  %1392 = vmatmul.mubr.f32.gmra.mrb[0].mxu0 %v1325
  %v1393 = vpop.f32.mrb[0].mxu0
  %v1394 = vadd.f32 0.0, %v1393
  %v1395 = vpop.f32.mrb[0].mxu0
  %1396 = vdwg.mxu0
  %v1397 = vmul.f32 %v1318, %v1318
  %v1399 = vsel %vm708, %v1397, 0
  %1401 = vmatprep.subr.mxu0 0.0
  %1402 = vmatpush1.msra.mxu0 %v446
  %1403 = vmatprep.subr.mxu0 0.0
  %1404 = vmatpush1.msra.mxu0 %v447
  %1405 = vmatprep.subr.mxu0 0.0
  %1406 = vmatpush1.msra.mxu0 %v448
  %1407 = vmatprep.subr.mxu0 0.0
  %1408 = vmatpush1.msra.mxu0 %v449
  %1409 = vmatprep.subr.mxu0 0.0
  %1410 = vmatpush1.msra.mxu0 0.0
  %1411 = vmatprep.subr.mxu0 0.0
  %1412 = vmatpush1.msra.mxu0 0.0
  %1413 = vmatprep.subr.mxu0 0.0
  %1414 = vmatpush1.msra.mxu0 0.0
  %1415 = vmatprep.subr.mxu0 0.0
  %1416 = vmatpush1.msra.mxu0 0.0
  %1417 = vmatprep.subr.mxu0 0.0
  %1418 = vmatpush1.msra.mxu0 0.0
  %1419 = vmatprep.subr.mxu0 0.0
  %1420 = vmatpush1.msra.mxu0 0.0
  %1421 = vmatprep.subr.mxu0 0.0
  %1422 = vmatpush1.msra.mxu0 0.0
  %1423 = vmatprep.subr.mxu0 0.0
  %1424 = vmatpush1.msra.mxu0 0.0
  %1425 = vmatprep.subr.mxu0 0.0
  %1426 = vmatpush1.msra.mxu0 0.0
  %1427 = vmatprep.subr.mxu0 0.0
  %1428 = vmatpush1.msra.mxu0 0.0
  %1429 = vmatprep.subr.mxu0 0.0
  %1430 = vmatpush1.msra.mxu0 0.0
  %1431 = vmatprep.subr.mxu0 0.0
  %1432 = vmatpush1.msra.mxu0 0.0
  %1433 = vmatprep.subr.mxu0 0.0
  %1434 = vmatpush1.msra.mxu0 0.0
  %1435 = vmatprep.subr.mxu0 0.0
  %1436 = vmatpush1.msra.mxu0 0.0
  %1437 = vmatprep.subr.mxu0 0.0
  %1438 = vmatpush1.msra.mxu0 0.0
  %1439 = vmatprep.subr.mxu0 0.0
  %1440 = vmatpush1.msra.mxu0 0.0
  %1441 = vmatprep.subr.mxu0 0.0
  %1442 = vmatpush1.msra.mxu0 0.0
  %1443 = vmatprep.subr.mxu0 0.0
  %1444 = vmatpush1.msra.mxu0 0.0
  %1445 = vmatprep.subr.mxu0 0.0
  %1446 = vmatpush1.msra.mxu0 0.0
  %1447 = vmatprep.subr.mxu0 0.0
  %1448 = vmatpush1.msra.mxu0 0.0
  %1449 = vmatprep.subr.mxu0 0.0
  %1450 = vmatpush1.msra.mxu0 0.0
  %1451 = vmatprep.subr.mxu0 0.0
  %1452 = vmatpush1.msra.mxu0 0.0
  %1453 = vmatprep.subr.mxu0 0.0
  %1454 = vmatpush1.msra.mxu0 0.0
  %1455 = vmatprep.subr.mxu0 0.0
  %1456 = vmatpush1.msra.mxu0 0.0
  %1457 = vmatprep.subr.mxu0 0.0
  %1458 = vmatpush1.msra.mxu0 0.0
  %1459 = vmatprep.subr.mxu0 0.0
  %1460 = vmatpush1.msra.mxu0 0.0
  %1461 = vmatprep.subr.mxu0 0.0
  %1462 = vmatpush1.msra.mxu0 0.0
  %1463 = vmatprep.subr.mxu0 0.0
  %1464 = vmatpush1.msra.mxu0 0.0
  %1465 = vmatprep.mubr.f32.mxu0 0.0
  %1466 = vmatmul.mubr.f32.gmra.mrb[0].mxu0 %v1399
  %v1467 = vpop.f32.mrb[0].mxu0
  %v1468 = vadd.f32 0.0, %v1467
  %v1469 = vpop.f32.mrb[0].mxu0
  %1470 = vdwg.mxu0
  %v1471 = vmax.f32 %v1468, 1e-24
  %v1472 = vrsqrt.pop %v1471
  %v1473 = vmul.f32 %v1394, %v1472
  %v1474 = vmul.f32 %v1473, %v972
  %1476 = vrot.lane.b32.xlu0 %v1474, 2
  %v1477 = vpop.permute.xlu0 %1476
  %v1479 = vmul.f32 %v688, %v1477
  %1481 = vrot.lane.b32.xlu0 %v1231, 1
  %v1482 = vpop.permute.xlu0 %1481
  %vm1484 = vcmp.gt.f32.partialorder %v1479, %v1482
  %v1485 = vsel %vm1484, %v1479, %v1482
  %1487 = vrot.lane.b32.xlu0 %v1232, 1
  %v1488 = vpop.permute.xlu0 %1487
  %v1490 = vsel %vm1484, 2.0, %v1488
  %1491 = vrot.lane.b32.xlu0 %v978, 32
  %v1492 = vpop.permute.xlu0 %1491
  %v1494 = vsel %vm708, %v1492, 0
  %1496 = vmatprep.subr.bf16.mxu0 0
  %1497 = vmatpush1.bf16.msra.mxu0 %v704
  %1498 = vmatprep.subr.bf16.mxu0 0
  %1499 = vmatpush1.bf16.msra.mxu0 %v705
  %1500 = vmatprep.subr.bf16.mxu0 0
  %1501 = vmatpush1.bf16.msra.mxu0 0
  %1502 = vmatprep.subr.bf16.mxu0 0
  %1503 = vmatpush1.bf16.msra.mxu0 0
  %1504 = vmatprep.subr.bf16.mxu0 0
  %1505 = vmatpush1.bf16.msra.mxu0 0
  %1506 = vmatprep.subr.bf16.mxu0 0
  %1507 = vmatpush1.bf16.msra.mxu0 0
  %1508 = vmatprep.subr.bf16.mxu0 0
  %1509 = vmatpush1.bf16.msra.mxu0 0
  %1510 = vmatprep.subr.bf16.mxu0 0
  %1511 = vmatpush1.bf16.msra.mxu0 0
  %1512 = vmatprep.subr.bf16.mxu0 0
  %1513 = vmatpush1.bf16.msra.mxu0 0
  %1514 = vmatprep.subr.bf16.mxu0 0
  %1515 = vmatpush1.bf16.msra.mxu0 0
  %1516 = vmatprep.subr.bf16.mxu0 0
  %1517 = vmatpush1.bf16.msra.mxu0 0
  %1518 = vmatprep.subr.bf16.mxu0 0
  %1519 = vmatpush1.bf16.msra.mxu0 0
  %1520 = vmatprep.subr.bf16.mxu0 0
  %1521 = vmatpush1.bf16.msra.mxu0 0
  %1522 = vmatprep.subr.bf16.mxu0 0
  %1523 = vmatpush1.bf16.msra.mxu0 0
  %1524 = vmatprep.subr.bf16.mxu0 0
  %1525 = vmatpush1.bf16.msra.mxu0 0
  %1526 = vmatprep.subr.bf16.mxu0 0
  %1527 = vmatpush1.bf16.msra.mxu0 0
  %1528 = vmatprep.mubr.bf16.mxu0 0
  %1529 = vmatmul.mubr.bf16.gmra.mrb[0].mxu0 %v1494
  %v1530 = vpop.f32.mrb[0].mxu0
  %v1531 = vadd.f32 %v694, %v1530
  %v1532 = vpop.f32.mrb[0].mxu0
  %v1533 = vpop.f32.mrb[0].mxu0
  %v1534 = vpop.f32.mrb[0].mxu0
  %1535 = vdwg.mxu0
  %v1536 = vmax.f32 %v1531, 0.0
  %v1537 = vpack.c.bf16 %v1536, %v1536
  %v1539 = vsel %vm708, %v1537, 0
  %1541 = vmatprep.subr.bf16.mxu0 0
  %1542 = vmatpush1.bf16.msra.mxu0 %v768
  %1543 = vmatprep.subr.bf16.mxu0 0
  %1544 = vmatpush1.bf16.msra.mxu0 %v769
  %1545 = vmatprep.subr.bf16.mxu0 0
  %1546 = vmatpush1.bf16.msra.mxu0 0
  %1547 = vmatprep.subr.bf16.mxu0 0
  %1548 = vmatpush1.bf16.msra.mxu0 0
  %1549 = vmatprep.subr.bf16.mxu0 0
  %1550 = vmatpush1.bf16.msra.mxu0 0
  %1551 = vmatprep.subr.bf16.mxu0 0
  %1552 = vmatpush1.bf16.msra.mxu0 0
  %1553 = vmatprep.subr.bf16.mxu0 0
  %1554 = vmatpush1.bf16.msra.mxu0 0
  %1555 = vmatprep.subr.bf16.mxu0 0
  %1556 = vmatpush1.bf16.msra.mxu0 0
  %1557 = vmatprep.subr.bf16.mxu0 0
  %1558 = vmatpush1.bf16.msra.mxu0 0
  %1559 = vmatprep.subr.bf16.mxu0 0
  %1560 = vmatpush1.bf16.msra.mxu0 0
  %1561 = vmatprep.subr.bf16.mxu0 0
  %1562 = vmatpush1.bf16.msra.mxu0 0
  %1563 = vmatprep.subr.bf16.mxu0 0
  %1564 = vmatpush1.bf16.msra.mxu0 0
  %1565 = vmatprep.subr.bf16.mxu0 0
  %1566 = vmatpush1.bf16.msra.mxu0 0
  %1567 = vmatprep.subr.bf16.mxu0 0
  %1568 = vmatpush1.bf16.msra.mxu0 0
  %1569 = vmatprep.subr.bf16.mxu0 0
  %1570 = vmatpush1.bf16.msra.mxu0 0
  %1571 = vmatprep.subr.bf16.mxu0 0
  %1572 = vmatpush1.bf16.msra.mxu0 0
  %1573 = vmatprep.mubr.bf16.mxu0 0
  %1574 = vmatmul.mubr.bf16.gmra.mrb[0].mxu0 %v1539
  %v1575 = vpop.f32.mrb[0].mxu0
  %v1576 = vadd.f32 %v758, %v1575
  %v1577 = vpop.f32.mrb[0].mxu0
  %v1578 = vpop.f32.mrb[0].mxu0
  %v1579 = vpop.f32.mrb[0].mxu0
  %1580 = vdwg.mxu0
  %v1581 = vmul.f32 %v1576, %v817
  %v1583 = vsel %vm708, %v1581, 0
  %1585 = vmatprep.subr.mxu0 0.0
  %1586 = vmatpush1.msra.mxu0 %v446
  %1587 = vmatprep.subr.mxu0 0.0
  %1588 = vmatpush1.msra.mxu0 %v447
  %1589 = vmatprep.subr.mxu0 0.0
  %1590 = vmatpush1.msra.mxu0 %v448
  %1591 = vmatprep.subr.mxu0 0.0
  %1592 = vmatpush1.msra.mxu0 %v449
  %1593 = vmatprep.subr.mxu0 0.0
  %1594 = vmatpush1.msra.mxu0 0.0
  %1595 = vmatprep.subr.mxu0 0.0
  %1596 = vmatpush1.msra.mxu0 0.0
  %1597 = vmatprep.subr.mxu0 0.0
  %1598 = vmatpush1.msra.mxu0 0.0
  %1599 = vmatprep.subr.mxu0 0.0
  %1600 = vmatpush1.msra.mxu0 0.0
  %1601 = vmatprep.subr.mxu0 0.0
  %1602 = vmatpush1.msra.mxu0 0.0
  %1603 = vmatprep.subr.mxu0 0.0
  %1604 = vmatpush1.msra.mxu0 0.0
  %1605 = vmatprep.subr.mxu0 0.0
  %1606 = vmatpush1.msra.mxu0 0.0
  %1607 = vmatprep.subr.mxu0 0.0
  %1608 = vmatpush1.msra.mxu0 0.0
  %1609 = vmatprep.subr.mxu0 0.0
  %1610 = vmatpush1.msra.mxu0 0.0
  %1611 = vmatprep.subr.mxu0 0.0
  %1612 = vmatpush1.msra.mxu0 0.0
  %1613 = vmatprep.subr.mxu0 0.0
  %1614 = vmatpush1.msra.mxu0 0.0
  %1615 = vmatprep.subr.mxu0 0.0
  %1616 = vmatpush1.msra.mxu0 0.0
  %1617 = vmatprep.subr.mxu0 0.0
  %1618 = vmatpush1.msra.mxu0 0.0
  %1619 = vmatprep.subr.mxu0 0.0
  %1620 = vmatpush1.msra.mxu0 0.0
  %1621 = vmatprep.subr.mxu0 0.0
  %1622 = vmatpush1.msra.mxu0 0.0
  %1623 = vmatprep.subr.mxu0 0.0
  %1624 = vmatpush1.msra.mxu0 0.0
  %1625 = vmatprep.subr.mxu0 0.0
  %1626 = vmatpush1.msra.mxu0 0.0
  %1627 = vmatprep.subr.mxu0 0.0
  %1628 = vmatpush1.msra.mxu0 0.0
  %1629 = vmatprep.subr.mxu0 0.0
  %1630 = vmatpush1.msra.mxu0 0.0
  %1631 = vmatprep.subr.mxu0 0.0
  %1632 = vmatpush1.msra.mxu0 0.0
  %1633 = vmatprep.subr.mxu0 0.0
  %1634 = vmatpush1.msra.mxu0 0.0
  %1635 = vmatprep.subr.mxu0 0.0
  %1636 = vmatpush1.msra.mxu0 0.0
  %1637 = vmatprep.subr.mxu0 0.0
  %1638 = vmatpush1.msra.mxu0 0.0
  %1639 = vmatprep.subr.mxu0 0.0
  %1640 = vmatpush1.msra.mxu0 0.0
  %1641 = vmatprep.subr.mxu0 0.0
  %1642 = vmatpush1.msra.mxu0 0.0
  %1643 = vmatprep.subr.mxu0 0.0
  %1644 = vmatpush1.msra.mxu0 0.0
  %1645 = vmatprep.subr.mxu0 0.0
  %1646 = vmatpush1.msra.mxu0 0.0
  %1647 = vmatprep.subr.mxu0 0.0
  %1648 = vmatpush1.msra.mxu0 0.0
  %1649 = vmatprep.mubr.f32.mxu0 0.0
  %1650 = vmatmul.mubr.f32.gmra.mrb[0].mxu0 %v1583
  %v1651 = vpop.f32.mrb[0].mxu0
  %v1652 = vadd.f32 0.0, %v1651
  %v1653 = vpop.f32.mrb[0].mxu0
  %1654 = vdwg.mxu0
  %v1655 = vmul.f32 %v1576, %v1576
  %v1657 = vsel %vm708, %v1655, 0
  %1659 = vmatprep.subr.mxu0 0.0
  %1660 = vmatpush1.msra.mxu0 %v446
  %1661 = vmatprep.subr.mxu0 0.0
  %1662 = vmatpush1.msra.mxu0 %v447
  %1663 = vmatprep.subr.mxu0 0.0
  %1664 = vmatpush1.msra.mxu0 %v448
  %1665 = vmatprep.subr.mxu0 0.0
  %1666 = vmatpush1.msra.mxu0 %v449
  %1667 = vmatprep.subr.mxu0 0.0
  %1668 = vmatpush1.msra.mxu0 0.0
  %1669 = vmatprep.subr.mxu0 0.0
  %1670 = vmatpush1.msra.mxu0 0.0
  %1671 = vmatprep.subr.mxu0 0.0
  %1672 = vmatpush1.msra.mxu0 0.0
  %1673 = vmatprep.subr.mxu0 0.0
  %1674 = vmatpush1.msra.mxu0 0.0
  %1675 = vmatprep.subr.mxu0 0.0
  %1676 = vmatpush1.msra.mxu0 0.0
  %1677 = vmatprep.subr.mxu0 0.0
  %1678 = vmatpush1.msra.mxu0 0.0
  %1679 = vmatprep.subr.mxu0 0.0
  %1680 = vmatpush1.msra.mxu0 0.0
  %1681 = vmatprep.subr.mxu0 0.0
  %1682 = vmatpush1.msra.mxu0 0.0
  %1683 = vmatprep.subr.mxu0 0.0
  %1684 = vmatpush1.msra.mxu0 0.0
  %1685 = vmatprep.subr.mxu0 0.0
  %1686 = vmatpush1.msra.mxu0 0.0
  %1687 = vmatprep.subr.mxu0 0.0
  %1688 = vmatpush1.msra.mxu0 0.0
  %1689 = vmatprep.subr.mxu0 0.0
  %1690 = vmatpush1.msra.mxu0 0.0
  %1691 = vmatprep.subr.mxu0 0.0
  %1692 = vmatpush1.msra.mxu0 0.0
  %1693 = vmatprep.subr.mxu0 0.0
  %1694 = vmatpush1.msra.mxu0 0.0
  %1695 = vmatprep.subr.mxu0 0.0
  %1696 = vmatpush1.msra.mxu0 0.0
  %1697 = vmatprep.subr.mxu0 0.0
  %1698 = vmatpush1.msra.mxu0 0.0
  %1699 = vmatprep.subr.mxu0 0.0
  %1700 = vmatpush1.msra.mxu0 0.0
  %1701 = vmatprep.subr.mxu0 0.0
  %1702 = vmatpush1.msra.mxu0 0.0
  %1703 = vmatprep.subr.mxu0 0.0
  %1704 = vmatpush1.msra.mxu0 0.0
  %1705 = vmatprep.subr.mxu0 0.0
  %1706 = vmatpush1.msra.mxu0 0.0
  %1707 = vmatprep.subr.mxu0 0.0
  %1708 = vmatpush1.msra.mxu0 0.0
  %1709 = vmatprep.subr.mxu0 0.0
  %1710 = vmatpush1.msra.mxu0 0.0
  %1711 = vmatprep.subr.mxu0 0.0
  %1712 = vmatpush1.msra.mxu0 0.0
  %1713 = vmatprep.subr.mxu0 0.0
  %1714 = vmatpush1.msra.mxu0 0.0
  %1715 = vmatprep.subr.mxu0 0.0
  %1716 = vmatpush1.msra.mxu0 0.0
  %1717 = vmatprep.subr.mxu0 0.0
  %1718 = vmatpush1.msra.mxu0 0.0
  %1719 = vmatprep.subr.mxu0 0.0
  %1720 = vmatpush1.msra.mxu0 0.0
  %1721 = vmatprep.subr.mxu0 0.0
  %1722 = vmatpush1.msra.mxu0 0.0
  %1723 = vmatprep.mubr.f32.mxu0 0.0
  %1724 = vmatmul.mubr.f32.gmra.mrb[0].mxu0 %v1657
  %v1725 = vpop.f32.mrb[0].mxu0
  %v1726 = vadd.f32 0.0, %v1725
  %v1727 = vpop.f32.mrb[0].mxu0
  %1728 = vdwg.mxu0
  %v1729 = vmax.f32 %v1726, 1e-24
  %v1730 = vrsqrt.pop %v1729
  %v1731 = vmul.f32 %v1652, %v1730
  %v1732 = vmul.f32 %v1731, %v972
  %1734 = vrot.lane.b32.xlu0 %v1732, 3
  %v1735 = vpop.permute.xlu0 %1734
  %v1737 = vmul.f32 %v688, %v1735
  %1739 = vrot.lane.b32.xlu0 %v1485, 1
  %v1740 = vpop.permute.xlu0 %1739
  %vm1742 = vcmp.gt.f32.partialorder %v1737, %v1740
  %v1743 = vsel %vm1742, %v1737, %v1740
  %1745 = vrot.lane.b32.xlu0 %v1490, 1
  %v1746 = vpop.permute.xlu0 %1745
  %v1748 = vsel %vm1742, 3.0, %v1746
  %v1749 = vld [vmem:[%s0] sm:$0xf]
  %v1750 = vld [vmem:[%s17] sm:$0xf]
  %v1751 = vld [vmem:[%s17 + $0x4] sm:$0xf]
  %v1752 = vld [vmem:[%s17 + $0x8] sm:$0xf]
  %v1753 = vld [vmem:[%s17 + $0xc] sm:$0xf]
  %v1754 = vld [vmem:[%s18] sm:$0x1]
  %v1756 = vlaneseq
  %v1757 = vshrl.u32 %v1756, 7
  %v1758 = vsub.s32 0, %v1757
  %v1759 = vrot.slane %v1754, %v1758
  %v1765 = vunpack.c.l.b16 %v1750
  %v1766 = vunpack.c.l.b16 %v1751
  %v1767 = vunpack.c.l.b16 %v1752
  %v1768 = vunpack.c.l.b16 %v1753
  %v1769 = vpack.c.b16 %v1766, %v1765
  %v1770 = vpack.c.b16 %v1768, %v1767
  %v1774 = vsel %vm708, %v1749, 0
  %1776 = vmatprep.subr.bf16.mxu0 0
  %1777 = vmatpush1.bf16.msra.mxu0 %v1769
  %1778 = vmatprep.subr.bf16.mxu0 0
  %1779 = vmatpush1.bf16.msra.mxu0 %v1770
  %1780 = vmatprep.subr.bf16.mxu0 0
  %1781 = vmatpush1.bf16.msra.mxu0 0
  %1782 = vmatprep.subr.bf16.mxu0 0
  %1783 = vmatpush1.bf16.msra.mxu0 0
  %1784 = vmatprep.subr.bf16.mxu0 0
  %1785 = vmatpush1.bf16.msra.mxu0 0
  %1786 = vmatprep.subr.bf16.mxu0 0
  %1787 = vmatpush1.bf16.msra.mxu0 0
  %1788 = vmatprep.subr.bf16.mxu0 0
  %1789 = vmatpush1.bf16.msra.mxu0 0
  %1790 = vmatprep.subr.bf16.mxu0 0
  %1791 = vmatpush1.bf16.msra.mxu0 0
  %1792 = vmatprep.subr.bf16.mxu0 0
  %1793 = vmatpush1.bf16.msra.mxu0 0
  %1794 = vmatprep.subr.bf16.mxu0 0
  %1795 = vmatpush1.bf16.msra.mxu0 0
  %1796 = vmatprep.subr.bf16.mxu0 0
  %1797 = vmatpush1.bf16.msra.mxu0 0
  %1798 = vmatprep.subr.bf16.mxu0 0
  %1799 = vmatpush1.bf16.msra.mxu0 0
  %1800 = vmatprep.subr.bf16.mxu0 0
  %1801 = vmatpush1.bf16.msra.mxu0 0
  %1802 = vmatprep.subr.bf16.mxu0 0
  %1803 = vmatpush1.bf16.msra.mxu0 0
  %1804 = vmatprep.subr.bf16.mxu0 0
  %1805 = vmatpush1.bf16.msra.mxu0 0
  %1806 = vmatprep.subr.bf16.mxu0 0
  %1807 = vmatpush1.bf16.msra.mxu0 0
  %1808 = vmatprep.mubr.bf16.mxu0 0
  %1809 = vmatmul.mubr.bf16.gmra.mrb[0].mxu0 %v1774
  %v1810 = vpop.f32.mrb[0].mxu0
  %v1811 = vadd.f32 %v1759, %v1810
  %v1812 = vpop.f32.mrb[0].mxu0
  %v1813 = vpop.f32.mrb[0].mxu0
  %v1814 = vpop.f32.mrb[0].mxu0
  %1815 = vdwg.mxu0
  %vm1816 = vcmask 23552
  %v1817 = vsel %vm1816, %v1811, -inf
  %1818 = vmax.xlane.f32.xlu0 %v1817
  %v1819 = vpop.xlane.xlu0 %1818
  %v1820 = vsub.f32 %v1811, %v1819
  %v1821 = vmul.f32 %v1820, 1.442695
  %v1822 = vpow.pop %v1821
  %v1823 = vsel %vm1816, %v1822, 0.0
  %1824 = vadd.xlane.f32.xlu0 %v1823
  %v1825 = vpop.xlane.xlu0 %1824
  %v1826 = vrcp.pop %v1825
  %v1827 = vmul.f32 %v1822, %v1826
  %v1828 = vmul.f32 %v1827, %v677
  %1830 = vrot.lane.b32.xlu0 %v1828, 127
  %v1831 = vpop.permute.xlu0 %1830
  %v1833 = vadd.f32 %v1828, %v1831
  %1835 = vrot.lane.b32.xlu0 %v1743, 127
  %v1836 = vpop.permute.xlu0 %1835
  %v1838 = vmul.f32 %v1827, %v1836
  %1840 = vrot.lane.b32.xlu0 %v1838, 126
  %v1841 = vpop.permute.xlu0 %1840
  %v1843 = vadd.f32 %v1833, %v1841
  %1845 = vrot.lane.b32.xlu0 %v1827, 1
  %v1846 = vpop.permute.xlu0 %1845
  %1849 = vrot.lane.b32.xlu0 %v677, 4
  %v1850 = vpop.permute.xlu0 %1849
  %1852 = vrot.lane.b32.xlu0 %v1743, 3
  %v1853 = vpop.permute.xlu0 %1852
  %1856 = vrot.lane.b32.xlu0 %v1748, 4
  %v1857 = vpop.permute.xlu0 %1856
  %vm1859 = vcmask 7168
  %v1860 = vsel %vm1859, %v1843, %v1846
  %vm1861 = vcmask 31744
  %v1862 = vsel %vm1861, %v1860, %v1850
  %vm1863 = vcmask 48128
  %v1864 = vsel %vm1863, %v1862, %v1853
  %vm1865 = vcmask 56320
  %v1866 = vsel %vm1865, %v1864, %v1857
  %vm1867 = vcmask 64512
  %v1868 = vsel %vm1867, %v1866, 0.0
  %1869 = vst [vmem:[%s22] sm:$0xff] %v1868
  // Predicated region
  $region90: #{joint_matching_forward.1} parent=0 // pred_check
    _
  $region91: #{joint_matching_forward.1} parent=0 // pred_check_branch
    %1871 = sbr.rel (0) target = $region93
  $region92: #{joint_matching_forward.1} parent=0 // pred_region
    _
  $region93: #{joint_matching_forward.1} parent=0 // pred_fallthru
    _
  // Predicated region
  $region94: #{joint_matching_forward.1} parent=0 // pred_check
    _
  $region95: #{joint_matching_forward.1} parent=0 // pred_check_branch
    %1873 = sbr.rel (0) target = $region97
  $region96: #{joint_matching_forward.1} parent=0 // pred_region
    _
  $region97: #{joint_matching_forward.1} parent=0 // pred_fallthru
    _

</llo_original>
